<compile_context>
chip_gen: v7x
topology: tpu7x:2x2x1
jax: 0.10.0
libtpu: 0.0.40
codegen_flags: <defaults>
</compile_context>

<pallas_src>
import functools

import jax
import jax.numpy as jnp
import numpy as np
from jax.experimental import pallas as pl
from jax.experimental.pallas import tpu as pltpu


LANE = 128


def _round_up(n, m):
    return ((n + m - 1) // m) * m


def _softplus(v):
    # torch.nn.Softplus(beta=1, threshold=20): linear above threshold.
    # exp overflow in the untaken branch only produces inf (not NaN), and the
    # where() selects v there, so no clamp is needed. Kept in f32 (v5e's
    # EUP/VPU have no bf16 path; one exp + one log1p per element).
    return jnp.where(v > 20.0, v, jnp.log1p(jnp.exp(v)))


def _icnn_kernel(L, H_pad, x_ref, wx_all_ref, *rest):
    """Whole ICNN forward for one batch tile, entirely in VMEM.

    rest = [Wz_1, ..., Wz_{L-1},      # (H_pad, H_pad) hidden-to-hidden weights
            Wz_last_tiled,            # (H_pad, D_pad): wz_last tiled over D_out cols
            out_ref]                  # (tile_b, D_pad)

    x_ref  : (tile_b, D_in + 1), last column is ones (bias fold).
    wx_all : [Wz0 | Wx_1 | ... | Wx_{L-1} | Wx_last], each block padded to a
             multiple of 128 lanes; last row holds the biases.
    """
    wz_mid = rest[: L - 1]
    wz_last_ref = rest[L - 1]
    out_ref = rest[L]

    cd = wx_all_ref.dtype            # matmul operand dtype (f32 or bf16)
    x = x_ref[...]

    # Single wide MXU pass: every x-path contribution + every bias at once.
    # Accumulate in f32 regardless of operand dtype.
    xc = jnp.dot(x, wx_all_ref[...], preferred_element_type=jnp.float32)

    # First layer: softplus(Wz0 x + bz0) == first H_pad (lane-aligned) columns.
    z = _softplus(xc[:, :H_pad])

    # Hidden layers: softplus(Wz_i z + Wx_{i-1} x + bx_{i-1}); the x/bias part
    # is already sitting in xc at a 128-lane-aligned offset, so each layer is
    # one H_pad x H_pad matmul + add. Padded Wz rows are zero, so the
    # softplus(0) junk in padded z lanes never contributes.
    # TODO(synk): for very large L*H_pad, compute x@Wx_i per layer instead of
    # keeping the whole xc live (contraction dim is only D_in+1).
    for i, wz in enumerate(wz_mid):
        z = _softplus(
            jnp.dot(z.astype(cd), wz[...], preferred_element_type=jnp.float32)
            + xc[:, (i + 1) * H_pad:(i + 2) * H_pad]
        )

    # Output: the (B,1)+(B,D_out) broadcast is baked into Wz_last_tiled;
    # Wx_last (padded to D_pad lanes) is the tail of xc. Lane-dense store.
    out_ref[...] = (
        jnp.dot(z.astype(cd), wz_last_ref[...], preferred_element_type=jnp.float32)
        + xc[:, L * H_pad:]
    )


def pack_params(params, *, num_hidden_layers, compute_dtype=jnp.float32):
    """Fuse the flat (unfused) parameter list into the kernel's layout."""
    L = num_hidden_layers
    idx = 0
    wz0 = params[idx]; bz0 = params[idx + 1]; idx += 2
    wz_mid = list(params[idx: idx + L - 1]); idx += L - 1
    wz_last = params[idx]; idx += 1
    wx_mid = []
    for _ in range(L - 1):
        wx_mid.append((params[idx], params[idx + 1])); idx += 2
    wx_last = params[idx]

    D_in, H = wz0.shape
    D_out = wx_last.shape[1]
    H_pad = _round_up(H, LANE)                     # lane-aligned hidden width
    D_pad = _round_up(max(D_out, LANE), LANE)      # lane-dense output width

    def pad_cols(w, width):
        return jnp.pad(w, ((0, 0), (0, width - w.shape[1])))

    # x-path column groups, each padded to a 128-lane multiple so the kernel's
    # xc slices land on vreg-tile boundaries.
    cols = [pad_cols(wz0, H_pad)]
    bias = [pad_cols(bz0, H_pad)]
    for (wx, bx) in wx_mid:
        cols.append(pad_cols(wx, H_pad))
        bias.append(pad_cols(bx, H_pad))
    cols.append(pad_cols(wx_last, D_pad))
    bias.append(jnp.zeros((1, D_pad), jnp.float32))
    # Fold the biases into the matmul: they become the last row of wx_all and
    # multiply the ones column appended to x.
    wx_all = jnp.concatenate(
        [jnp.concatenate(cols, axis=1), jnp.concatenate(bias, axis=1)], axis=0
    )

    # Hidden-to-hidden weights padded to (H_pad, H_pad); padded *rows* are
    # zero so padded z lanes (softplus(0)) never contribute.
    wz_mid_p = [jnp.pad(w, ((0, H_pad - H), (0, H_pad - H))) for w in wz_mid]

    # wz_last is (H, 1); tile across the D_out columns so a single matmul
    # realizes the (B,1)+(B,D_out) broadcast; zero-pad rows/cols to H_pad/D_pad.
    wz_last_tiled = jnp.pad(
        jnp.tile(wz_last, (1, D_out)), ((0, H_pad - H), (0, D_pad - D_out))
    )

    cd = compute_dtype
    return dict(
        wx_all=wx_all.astype(cd),
        wz_mid=[w.astype(cd) for w in wz_mid_p],
        wz_last=wz_last_tiled.astype(cd),
        H=H, H_pad=H_pad, D_in=D_in, D_out=D_out, D_pad=D_pad,
        compute_dtype=cd,
    )


def _choose_tile_b(B, requested=None):
    """Batch tile: MXU-aligned, and >=2 grid steps for dual-TC chips (v7x)
    whenever the batch is big enough; tiny batches stay one un-padded tile."""
    if requested is not None:
        return max(8, min(_round_up(requested, 8), _round_up(B, 8)))
    B8 = _round_up(B, 8)
    if B8 <= 128:
        return B8                      # single small tile; don't over-pad
    # Aim for >=2 parallel 128-row-multiple tiles (both v7x TensorCores get
    # work via dimension_semantics=("parallel",)); cap at 512 rows so the
    # per-tile VMEM footprint stays modest. Extra grid steps cost ~0.35 us on
    # single-TC chips (v5e/v6e), which is noise here.
    return max(128, min(512, _round_up(B8 // 2, 128)))


def icnn_forward(x, packed, *, num_hidden_layers, tile_b=None):
    B, D_in = x.shape
    L = num_hidden_layers
    H_pad, D_pad, D_out = packed["H_pad"], packed["D_pad"], packed["D_out"]
    cd = packed["compute_dtype"]

    tile_b = _choose_tile_b(B, tile_b)
    B_pad = _round_up(B, tile_b)

    # Append the ones column (bias fold) and zero-pad the batch to the tile.
    x_aug = jnp.concatenate([x, jnp.ones((B, 1), x.dtype)], axis=1)
    if B_pad != B:
        x_aug = jnp.pad(x_aug, ((0, B_pad - B), (0, 0)))
    x_aug = x_aug.astype(cd)

    params = [packed["wx_all"], *packed["wz_mid"], packed["wz_last"]]
    # Small constant-index weights: loaded whole, resident across grid steps.
    # TODO(synk): for large H on v7x, single-buffer these (pl.Buffered(1)) or
    # pipeline the per-layer Wz from HBM with pltpu.emit_pipeline; here the
    # whole (double-buffered) residency is a few hundred KiB.
    param_specs = [pl.BlockSpec(p.shape, lambda i: (0, 0)) for p in params]

    Wtot = L * H_pad + D_pad
    itemsize = jnp.dtype(cd).itemsize
    weight_bytes = sum(int(p.size) * itemsize for p in params)
    io_bytes = tile_b * (D_in + 1) * itemsize + tile_b * D_pad * 4
    scratch_bytes = tile_b * (Wtot + 2 * H_pad) * 4        # xc + live z (f32)
    # Size the scoped VMEM limit from actual residency (x2 for double-buffered
    # pipelining + headroom); keep well under v7x's 64 MiB physical.
    vmem_limit = int(min(48 << 20,
                         max(16 << 20,
                             2 * (2 * (weight_bytes + io_bytes) + scratch_bytes))))

    flops = 2 * B_pad * ((D_in + 1) * Wtot + (L - 1) * H_pad * H_pad + H_pad * D_pad)
    transcendentals = 2 * B_pad * H_pad * L                 # exp + log1p per element
    bytes_accessed = (B_pad * (D_in + 1) * itemsize + weight_bytes
                      + B_pad * D_pad * 4)

    out = pl.pallas_call(
        functools.partial(_icnn_kernel, L, H_pad),
        out_shape=jax.ShapeDtypeStruct((B_pad, D_pad), jnp.float32),
        grid_spec=pltpu.PrefetchScalarGridSpec(
            num_scalar_prefetch=0,
            grid=(B_pad // tile_b,),
            in_specs=[pl.BlockSpec((tile_b, D_in + 1), lambda i: (i, 0))]
                     + param_specs,
            out_specs=pl.BlockSpec((tile_b, D_pad), lambda i: (i, 0)),
        ),
        compiler_params=pltpu.CompilerParams(
            dimension_semantics=("parallel",),
            vmem_limit_bytes=vmem_limit,
        ),
        cost_estimate=pl.CostEstimate(
            flops=int(flops),
            transcendentals=int(transcendentals),
            bytes_accessed=int(bytes_accessed),
        ),
    )(x_aug, *params)
    return out[:B, :D_out]


def make_params(key, input_dim, hidden_dim, num_hidden_layers, output_dim):
    """Deterministic synthetic parameters (uniform, PyTorch-Linear-style scale)."""
    params = []

    def lin(key, fan_in, fan_out, bias):
        k1, k2 = jax.random.split(key)
        bound = 1.0 / np.sqrt(fan_in)
        w = jax.random.uniform(k1, (fan_in, fan_out), jnp.float32, -bound, bound)
        out = [w]
        if bias:
            out.append(
                jax.random.uniform(k2, (1, fan_out), jnp.float32, -bound, bound)
            )
        return out

    keys = jax.random.split(key, 2 * (num_hidden_layers + 1) + 4)
    ki = iter(range(len(keys)))

    # Wzs: Linear(in, hidden, bias) ; (L-1) x Linear(hidden, hidden, no bias) ;
    #      Linear(hidden, 1, no bias)
    params += lin(keys[next(ki)], input_dim, hidden_dim, bias=True)
    for _ in range(num_hidden_layers - 1):
        params += lin(keys[next(ki)], hidden_dim, hidden_dim, bias=False)
    params += lin(keys[next(ki)], hidden_dim, 1, bias=False)

    # Wxs: (L-1) x Linear(in, hidden, bias) ; Linear(in, output, no bias)
    for _ in range(num_hidden_layers - 1):
        params += lin(keys[next(ki)], input_dim, hidden_dim, bias=True)
    params += lin(keys[next(ki)], input_dim, output_dim, bias=False)
    return params


def icnn_reference(x, params, *, num_hidden_layers):
    """Plain-JAX reference mirroring the PyTorch forward (unfused weights)."""
    L = num_hidden_layers
    idx = 0
    wz0 = params[idx]; bz0 = params[idx + 1]; idx += 2
    wz_mid = params[idx: idx + L - 1]; idx += L - 1
    wz_last = params[idx]; idx += 1
    wx_mid = []
    for _ in range(L - 1):
        wx_mid.append((params[idx], params[idx + 1])); idx += 2
    wx_last = params[idx]

    z = jax.nn.softplus(x @ wz0 + bz0)
    for wz, (wx, bx) in zip(wz_mid, wx_mid):
        z = jax.nn.softplus(z @ wz + x @ wx + bx)
    return z @ wz_last + x @ wx_last


if __name__ == "__main__":
    INPUT_DIM = 4
    HIDDEN_DIM = 32
    NUM_HIDDEN_LAYERS = 3
    OUTPUT_DIM = 4
    BATCH = 256        # auto tile_b -> 2 x 128-row tiles (both v7x TCs busy)

    key = jax.random.PRNGKey(0)
    kx, kp = jax.random.split(key)
    x = jax.random.normal(kx, (BATCH, INPUT_DIM), dtype=jnp.float32)
    params = make_params(kp, INPUT_DIM, HIDDEN_DIM, NUM_HIDDEN_LAYERS, OUTPUT_DIM)
    ref = icnn_reference(x, params, num_hidden_layers=NUM_HIDDEN_LAYERS)

    # f32 matmul path: strict correctness check against the unfused reference.
    packed_f32 = pack_params(params, num_hidden_layers=NUM_HIDDEN_LAYERS,
                             compute_dtype=jnp.float32)
    out_f32 = jax.block_until_ready(
        icnn_forward(x, packed_f32, num_hidden_layers=NUM_HIDDEN_LAYERS))
    np.testing.assert_allclose(np.asarray(out_f32), np.asarray(ref),
                               rtol=5e-5, atol=5e-5)

    # bf16 matmul path (operands bf16, f32 accumulation + f32 softplus):
    # coarse precision smoke check only; strict check is the f32 path above.
    packed_bf16 = pack_params(params, num_hidden_layers=NUM_HIDDEN_LAYERS,
                              compute_dtype=jnp.bfloat16)
    out_bf16 = jax.block_until_ready(
        icnn_forward(x, packed_bf16, num_hidden_layers=NUM_HIDDEN_LAYERS))
    np.testing.assert_allclose(np.asarray(out_bf16), np.asarray(ref),
                               rtol=1e-1, atol=2e-1)

    print("KERNEL_OK")
</pallas_src>

<mosaic_0001>
module attributes {stable_mosaic.version = 11 : i64} {
  func.func @_icnn_kernel(%arg0: i32, %arg1: memref<128x5xf32, #tpu.memory_space<vmem>>, %arg2: memref<5x512xf32, #tpu.memory_space<vmem>>, %arg3: memref<128x128xf32, #tpu.memory_space<vmem>>, %arg4: memref<128x128xf32, #tpu.memory_space<vmem>>, %arg5: memref<128x128xf32, #tpu.memory_space<vmem>>, %arg6: memref<128x128xf32, #tpu.memory_space<vmem>>) attributes {dimension_semantics = [#tpu.dimension_semantics<parallel>], iteration_bounds = array<i64: 2>, scalar_prefetch = 0 : i64, scratch_operands = 0 : i64, tpu.core_type = #tpu.core_type<tc>, window_params = [{transform_indices = @transform_0, window_bounds = array<i64: 128, 5>}, {pipeline_mode = #tpu.pipeline_mode<synchronous>, transform_indices = @transform_1, window_bounds = array<i64: 5, 512>}, {pipeline_mode = #tpu.pipeline_mode<synchronous>, transform_indices = @transform_2, window_bounds = array<i64: 128, 128>}, {pipeline_mode = #tpu.pipeline_mode<synchronous>, transform_indices = @transform_3, window_bounds = array<i64: 128, 128>}, {pipeline_mode = #tpu.pipeline_mode<synchronous>, transform_indices = @transform_4, window_bounds = array<i64: 128, 128>}, {transform_indices = @transform_5, window_bounds = array<i64: 128, 128>}]} {
    %c0 = arith.constant 0 : index
    %c0_0 = arith.constant 0 : index
    %0 = vector.load %arg1[%c0, %c0_0] : memref<128x5xf32, #tpu.memory_space<vmem>>, vector<128x5xf32>
    %c0_1 = arith.constant 0 : index
    %c0_2 = arith.constant 0 : index
    %1 = vector.load %arg2[%c0_1, %c0_2] : memref<5x512xf32, #tpu.memory_space<vmem>>, vector<5x512xf32>
    %cst = arith.constant dense<0.000000e+00> : vector<128x512xf32>
    %2 = tpu.matmul %0, %1, %cst {dimension_numbers = #tpu.dot_dimension_numbers<[1], [0], [0], [1], [0, 0, 1, 1], [], []>} : vector<128x5xf32>, vector<5x512xf32>, vector<128x512xf32> -> vector<128x512xf32>
    %3 = vector.extract_strided_slice %2 {offsets = [0, 0], sizes = [128, 128], strides = [1, 1]} : vector<128x512xf32> to vector<128x128xf32>
    %cst_3 = arith.constant 2.000000e+01 : f32
    %4 = vector.broadcast %cst_3 : f32 to vector<128x128xf32>
    %5 = arith.cmpf ogt, %3, %4 : vector<128x128xf32>
    %6 = math.exp %3 : vector<128x128xf32>
    %7 = math.log1p %6 : vector<128x128xf32>
    %8 = arith.select %5, %3, %7 : vector<128x128xi1>, vector<128x128xf32>
    %c0_4 = arith.constant 0 : index
    %c0_5 = arith.constant 0 : index
    %9 = vector.load %arg3[%c0_4, %c0_5] : memref<128x128xf32, #tpu.memory_space<vmem>>, vector<128x128xf32>
    %cst_6 = arith.constant dense<0.000000e+00> : vector<128x128xf32>
    %10 = tpu.matmul %8, %9, %cst_6 {dimension_numbers = #tpu.dot_dimension_numbers<[1], [0], [0], [1], [0, 0, 1, 1], [], []>} : vector<128x128xf32>, vector<128x128xf32>, vector<128x128xf32> -> vector<128x128xf32>
    %11 = vector.extract_strided_slice %2 {offsets = [0, 128], sizes = [128, 128], strides = [1, 1]} : vector<128x512xf32> to vector<128x128xf32>
    %12 = arith.addf %10, %11 : vector<128x128xf32>
    %cst_7 = arith.constant 2.000000e+01 : f32
    %13 = vector.broadcast %cst_7 : f32 to vector<128x128xf32>
    %14 = arith.cmpf ogt, %12, %13 : vector<128x128xf32>
    %15 = math.exp %12 : vector<128x128xf32>
    %16 = math.log1p %15 : vector<128x128xf32>
    %17 = arith.select %14, %12, %16 : vector<128x128xi1>, vector<128x128xf32>
    %c0_8 = arith.constant 0 : index
    %c0_9 = arith.constant 0 : index
    %18 = vector.load %arg4[%c0_8, %c0_9] : memref<128x128xf32, #tpu.memory_space<vmem>>, vector<128x128xf32>
    %cst_10 = arith.constant dense<0.000000e+00> : vector<128x128xf32>
    %19 = tpu.matmul %17, %18, %cst_10 {dimension_numbers = #tpu.dot_dimension_numbers<[1], [0], [0], [1], [0, 0, 1, 1], [], []>} : vector<128x128xf32>, vector<128x128xf32>, vector<128x128xf32> -> vector<128x128xf32>
    %20 = vector.extract_strided_slice %2 {offsets = [0, 256], sizes = [128, 128], strides = [1, 1]} : vector<128x512xf32> to vector<128x128xf32>
    %21 = arith.addf %19, %20 : vector<128x128xf32>
    %cst_11 = arith.constant 2.000000e+01 : f32
    %22 = vector.broadcast %cst_11 : f32 to vector<128x128xf32>
    %23 = arith.cmpf ogt, %21, %22 : vector<128x128xf32>
    %24 = math.exp %21 : vector<128x128xf32>
    %25 = math.log1p %24 : vector<128x128xf32>
    %26 = arith.select %23, %21, %25 : vector<128x128xi1>, vector<128x128xf32>
    %c0_12 = arith.constant 0 : index
    %c0_13 = arith.constant 0 : index
    %27 = vector.load %arg5[%c0_12, %c0_13] : memref<128x128xf32, #tpu.memory_space<vmem>>, vector<128x128xf32>
    %cst_14 = arith.constant dense<0.000000e+00> : vector<128x128xf32>
    %28 = tpu.matmul %26, %27, %cst_14 {dimension_numbers = #tpu.dot_dimension_numbers<[1], [0], [0], [1], [0, 0, 1, 1], [], []>} : vector<128x128xf32>, vector<128x128xf32>, vector<128x128xf32> -> vector<128x128xf32>
    %29 = vector.extract_strided_slice %2 {offsets = [0, 384], sizes = [128, 128], strides = [1, 1]} : vector<128x512xf32> to vector<128x128xf32>
    %30 = arith.addf %28, %29 : vector<128x128xf32>
    %c0_15 = arith.constant 0 : index
    %c0_16 = arith.constant 0 : index
    %31 = vector.load %arg6[%c0_15, %c0_16] : memref<128x128xf32, #tpu.memory_space<vmem>>, vector<128x128xf32>
    tpu.vector_store %arg6[%c0_15, %c0_16], %30 {strides = array<i32>} : memref<128x128xf32, #tpu.memory_space<vmem>>, vector<128x128xf32>,
    return
  }
  func.func @transform_0(%arg0: i32) -> (i32, i32) {
    %c0_i32 = arith.constant 0 : i32
    %c0_i32_0 = arith.constant 0 : i32
    return %arg0, %c0_i32 : i32, i32
  }
  func.func @transform_1(%arg0: i32) -> (i32, i32) {
    %c0_i32 = arith.constant 0 : i32
    %c0_i32_0 = arith.constant 0 : i32
    %c0_i32_1 = arith.constant 0 : i32
    return %c0_i32, %c0_i32_0 : i32, i32
  }
  func.func @transform_2(%arg0: i32) -> (i32, i32) {
    %c0_i32 = arith.constant 0 : i32
    %c0_i32_0 = arith.constant 0 : i32
    %c0_i32_1 = arith.constant 0 : i32
    return %c0_i32, %c0_i32_0 : i32, i32
  }
  func.func @transform_3(%arg0: i32) -> (i32, i32) {
    %c0_i32 = arith.constant 0 : i32
    %c0_i32_0 = arith.constant 0 : i32
    %c0_i32_1 = arith.constant 0 : i32
    return %c0_i32, %c0_i32_0 : i32, i32
  }
  func.func @transform_4(%arg0: i32) -> (i32, i32) {
    %c0_i32 = arith.constant 0 : i32
    %c0_i32_0 = arith.constant 0 : i32
    %c0_i32_1 = arith.constant 0 : i32
    return %c0_i32, %c0_i32_0 : i32, i32
  }
  func.func @transform_5(%arg0: i32) -> (i32, i32) {
    %c0_i32 = arith.constant 0 : i32
    %c0_i32_0 = arith.constant 0 : i32
    return %arg0, %c0_i32 : i32, i32
  }
}

</mosaic_0001>

<llo_original>
// kernel: tpu_custom_call.1
$region0: #{tpu_custom_call.1}
  #allocation0 [shape = 'u32[]', space=smem, size = 0x4, offset = 0x4, fixed_abs, tag = 'smem constant byte address 0x4 - core index']
  #allocation1 [shape = 'u32[144,128]{1,0:T(1,128)}', space=vmem, size = 0x12000, scoped, tag = 'internal scratch']
  %s0 = inlined_call_operand.vmem [shape: f32[256,5], index: 0, kind: input, shape index: {}]
  %s1 = inlined_call_operand.hbm [shape: f32[5,512], index: 1, kind: input, shape index: {}]
  %s2 = inlined_call_operand.vmem [shape: f32[128,128], index: 2, kind: input, shape index: {}]
  %s3 = inlined_call_operand.vmem [shape: f32[128,128], index: 3, kind: input, shape index: {}]
  %s4 = inlined_call_operand.hbm [shape: f32[128,128], index: 4, kind: input, shape index: {}]
  %s5 = inlined_call_operand.hbm [shape: f32[256,128], index: 5, kind: output, shape index: {}]
  %s6 = sld [smem:[#allocation0]]
  $region61: #{tpu_custom_call.1} parent=0
    _
  %s8 = ssub.s32 1, %s6
  %s9 = scalar_select 0, %s8, %s6
  $region1: #{tpu_custom_call.1} parent=0
    #allocation2 [shape = 'u8[16384]{0}', space=vmem, size = 0x4000, scoped, tag = 'input window, operand 1, single buffered']
    #allocation3 [shape = 's32[2]{0}', space=sflag, size = 0x8, scoped, tag = 'scoped memory for tpu_custom_call.1']
    #allocation4 [shape = 's32[2]{0}', space=sflag, size = 0x8, scoped, tag = 'scoped memory for tpu_custom_call.1']
    #allocation5 [shape = 'u8[65536]{0}', space=vmem, size = 0x10000, scoped, tag = 'input window, operand 4, single buffered']
    #allocation6 [shape = 's32[1]{0}', space=sflag, size = 0x4, scoped, tag = 'scoped memory for tpu_custom_call.1']
    #allocation7 [shape = 'u8[131072]{0}', space=vmem, size = 0x20000, scoped, tag = 'output window, operand 0']
    %10 = vsyncpa [#allocation3], 0
    %11 = vsyncpa [#allocation6], 0
    %12 = vsyncpa [#allocation4], 0
    %s13 = scalar_lea.sflag [#allocation4], 1
    %14 = vsyncpa %s13, 0
    loop: start=0, step=1, limit=4
    $region2: #{tpu_custom_call.1} parent=1 // loop_pre_header
      _
    $region3: #{tpu_custom_call.1} parent=1 // loop_header
      %s16 = sphi 0, %s20
      %p17 = scmp.ge.s32.totalorder %s16, 4
      %s26 = sphi 0, %s28
      %s29 = sphi 0, %s26
      %s30 = sphi 0, %s29
      %s46 = sphi 0, %s30
      %s50 = sphi 0, %s50
      %s52 = sphi 0, %s50
      %s53 = sphi 0, %s52
      %s67 = sphi 0, %s53
      %s71 = sphi 0, %s71
      %s73 = sphi 0, %s71
      %s74 = sphi 0, %s73
      %s88 = sphi 0, %s74
      %s92 = sphi 0, %s92
      %s94 = sphi 0, %s92
      %s95 = sphi 0, %s94
      %s109 = sphi 0, %s95
      %s113 = sphi 0, %s113
      %s115 = sphi 0, %s113
      %s116 = sphi 0, %s115
      %s130 = sphi 0, %s116
      %s136 = sphi 0, %s138
      %s139 = sphi 0, %s136
      %s140 = sphi 0, %s139
      %s156 = sphi 0, %s140
    $region4: #{tpu_custom_call.1} parent=1 // loop_header_branch
      %19 = sbr.rel (%p17) target = $region8
    $region5: #{tpu_custom_call.1} parent=1 // loop_body
      %s21 = ssub.s32 %s16, 1
      %s22 = ssub.s32 %s16, 2
      %s23 = sadd.s32 %s16, 1
      %s24 = ssub.s32 %s16, %s23
      %p25 = scmp.eq.s32.totalorder %s24, 0
      %s27 = sadd.s32 %s26, 1
      %s28 = scalar_select %p25, %s26, %s27
      %p31 = pneg %p25
      %p32 = scmp.eq.s32.totalorder %s16, 1
      %p33 = por %p31, %p32
      %p34 = scmp.ne.s32.totalorder %s26, %s29
      %p35 = scmp.eq.s32.totalorder %s16, 0
      %p36 = por %p34, %p35
      %p37 = scmp.ne.s32.totalorder %s26, %s29
      %p38 = scmp.eq.s32.totalorder %s21, 1
      %p39 = por %p37, %p38
      %p40 = scmp.ne.s32.totalorder %s29, %s30
      %p41 = scmp.eq.s32.totalorder %s21, 0
      %p42 = por %p40, %p41
      %p43 = scmp.ne.s32.totalorder %s29, %s30
      %p44 = scmp.eq.s32.totalorder %s22, 1
      %p45 = por %p43, %p44
      %p47 = scmp.ne.s32.totalorder %s30, %s46
      %p48 = scmp.eq.s32.totalorder %s22, 0
      %p49 = por %p47, %p48
      %s51 = sadd.s32 %s50, 1
      %p54 = scmp.eq.s32.totalorder %s16, 1
      %p55 = scmp.ne.s32.totalorder %s50, %s52
      %p56 = scmp.eq.s32.totalorder %s16, 0
      %p57 = por %p55, %p56
      %p58 = scmp.ne.s32.totalorder %s50, %s52
      %p59 = scmp.eq.s32.totalorder %s21, 1
      %p60 = por %p58, %p59
      %p61 = scmp.ne.s32.totalorder %s52, %s53
      %p62 = scmp.eq.s32.totalorder %s21, 0
      %p63 = por %p61, %p62
      %p64 = scmp.ne.s32.totalorder %s52, %s53
      %p65 = scmp.eq.s32.totalorder %s22, 1
      %p66 = por %p64, %p65
      %p68 = scmp.ne.s32.totalorder %s53, %s67
      %p69 = scmp.eq.s32.totalorder %s22, 0
      %p70 = por %p68, %p69
      %s72 = sadd.s32 %s71, 1
      %p75 = scmp.eq.s32.totalorder %s16, 1
      %p76 = scmp.ne.s32.totalorder %s71, %s73
      %p77 = scmp.eq.s32.totalorder %s16, 0
      %p78 = por %p76, %p77
      %p79 = scmp.ne.s32.totalorder %s71, %s73
      %p80 = scmp.eq.s32.totalorder %s21, 1
      %p81 = por %p79, %p80
      %p82 = scmp.ne.s32.totalorder %s73, %s74
      %p83 = scmp.eq.s32.totalorder %s21, 0
      %p84 = por %p82, %p83
      %p85 = scmp.ne.s32.totalorder %s73, %s74
      %p86 = scmp.eq.s32.totalorder %s22, 1
      %p87 = por %p85, %p86
      %p89 = scmp.ne.s32.totalorder %s74, %s88
      %p90 = scmp.eq.s32.totalorder %s22, 0
      %p91 = por %p89, %p90
      %s93 = sadd.s32 %s92, 1
      %p96 = scmp.eq.s32.totalorder %s16, 1
      %p97 = scmp.ne.s32.totalorder %s92, %s94
      %p98 = scmp.eq.s32.totalorder %s16, 0
      %p99 = por %p97, %p98
      %p100 = scmp.ne.s32.totalorder %s92, %s94
      %p101 = scmp.eq.s32.totalorder %s21, 1
      %p102 = por %p100, %p101
      %p103 = scmp.ne.s32.totalorder %s94, %s95
      %p104 = scmp.eq.s32.totalorder %s21, 0
      %p105 = por %p103, %p104
      %p106 = scmp.ne.s32.totalorder %s94, %s95
      %p107 = scmp.eq.s32.totalorder %s22, 1
      %p108 = por %p106, %p107
      %p110 = scmp.ne.s32.totalorder %s95, %s109
      %p111 = scmp.eq.s32.totalorder %s22, 0
      %p112 = por %p110, %p111
      %s114 = sadd.s32 %s113, 1
      %p117 = scmp.eq.s32.totalorder %s16, 1
      %p118 = scmp.ne.s32.totalorder %s113, %s115
      %p119 = scmp.eq.s32.totalorder %s16, 0
      %p120 = por %p118, %p119
      %p121 = scmp.ne.s32.totalorder %s113, %s115
      %p122 = scmp.eq.s32.totalorder %s21, 1
      %p123 = por %p121, %p122
      %p124 = scmp.ne.s32.totalorder %s115, %s116
      %p125 = scmp.eq.s32.totalorder %s21, 0
      %p126 = por %p124, %p125
      %p127 = scmp.ne.s32.totalorder %s115, %s116
      %p128 = scmp.eq.s32.totalorder %s22, 1
      %p129 = por %p127, %p128
      %p131 = scmp.ne.s32.totalorder %s116, %s130
      %p132 = scmp.eq.s32.totalorder %s22, 0
      %p133 = por %p131, %p132
      %s134 = ssub.s32 %s16, %s23
      %p135 = scmp.eq.s32.totalorder %s134, 0
      %s137 = sadd.s32 %s136, 1
      %s138 = scalar_select %p135, %s136, %s137
      %p141 = pneg %p135
      %p142 = scmp.eq.s32.totalorder %s16, 1
      %p143 = por %p141, %p142
      %p144 = scmp.ne.s32.totalorder %s136, %s139
      %p145 = scmp.eq.s32.totalorder %s16, 0
      %p146 = por %p144, %p145
      %p147 = scmp.ne.s32.totalorder %s136, %s139
      %p148 = scmp.eq.s32.totalorder %s21, 1
      %p149 = por %p147, %p148
      %p150 = scmp.ne.s32.totalorder %s139, %s140
      %p151 = scmp.eq.s32.totalorder %s21, 0
      %p152 = por %p150, %p151
      %p153 = scmp.ne.s32.totalorder %s139, %s140
      %p154 = scmp.eq.s32.totalorder %s22, 1
      %p155 = por %p153, %p154
      %p157 = scmp.ne.s32.totalorder %s140, %s156
      %p158 = scmp.eq.s32.totalorder %s22, 0
      %p159 = por %p157, %p158
      %p160 = scmp.le.s32.totalorder 1, %s16
      %p161 = scmp.lt.s32.totalorder %s16, 3
      %p162 = pnand %p160, %p161
      %p163 = pneg %p162
      // Predicated region
      $region9: #{tpu_custom_call.1} parent=5 // pred_check
        _
      $region10: #{tpu_custom_call.1} parent=5 // pred_check_branch
        %165 = sbr.rel (%p162) target = $region12
      $region11: #{tpu_custom_call.1} parent=5 // pred_region
        %s166 = ssub.s32 %s16, 1
        // Predicated region
        $region13: #{tpu_custom_call.1} parent=11 // pred_check
          %p167 = pneg %p63
        $region14: #{tpu_custom_call.1} parent=11 // pred_check_branch
          %169 = sbr.rel (%p167) target = $region16
        $region15: #{tpu_custom_call.1} parent=11 // pred_region
          %s171 = ssub.s32 512, 512
          %172 = vsyncadd [#allocation3], %s171
          %s174 = sshll.u32 [#allocation2], 4
          %s175 = int_to_ptr.vmem [resolvable:$true] %s174
          %177 = dma.hbm_to_vmem [thread:$0]  %s1, 512, %s175, [#allocation3]
        $region16: #{tpu_custom_call.1} parent=11 // pred_fallthru
          _
        // Predicated region
        $region17: #{tpu_custom_call.1} parent=11 // pred_check
          %p178 = pneg %p84
        $region18: #{tpu_custom_call.1} parent=11 // pred_check_branch
          %180 = sbr.rel (%p178) target = $region20
        $region19: #{tpu_custom_call.1} parent=11 // pred_region
          _
        $region20: #{tpu_custom_call.1} parent=11 // pred_fallthru
          _
        // Predicated region
        $region21: #{tpu_custom_call.1} parent=11 // pred_check
          %p181 = pneg %p105
        $region22: #{tpu_custom_call.1} parent=11 // pred_check_branch
          %183 = sbr.rel (%p181) target = $region24
        $region23: #{tpu_custom_call.1} parent=11 // pred_region
          _
        $region24: #{tpu_custom_call.1} parent=11 // pred_fallthru
          _
        // Predicated region
        $region25: #{tpu_custom_call.1} parent=11 // pred_check
          %p184 = pneg %p126
        $region26: #{tpu_custom_call.1} parent=11 // pred_check_branch
          %186 = sbr.rel (%p184) target = $region28
        $region27: #{tpu_custom_call.1} parent=11 // pred_region
          %s188 = ssub.s32 2048, 2048
          %189 = vsyncadd [#allocation6], %s188
          %s190 = sshll.u32 [#allocation5], 4
          %s191 = int_to_ptr.vmem [resolvable:$true] %s190
          %196 = dma.hbm_to_vmem [thread:$0]  %s4, 2048, %s191, [#allocation6], 128, 128, 8
        $region28: #{tpu_custom_call.1} parent=11 // pred_fallthru
          _
      $region12: #{tpu_custom_call.1} parent=5 // pred_fallthru
        _
      %p197 = scmp.lt.s32.totalorder %s16, 2
      // Predicated region
      $region29: #{tpu_custom_call.1} parent=5 // pred_check
        %p198 = pneg %p197
      $region30: #{tpu_custom_call.1} parent=5 // pred_check_branch
        %200 = sbr.rel (%p198) target = $region32
      $region31: #{tpu_custom_call.1} parent=5 // pred_region
        // Predicated region
        $region33: #{tpu_custom_call.1} parent=31 // pred_check
          %p201 = pneg %p36
        $region34: #{tpu_custom_call.1} parent=31 // pred_check_branch
          %203 = sbr.rel (%p201) target = $region36
        $region35: #{tpu_custom_call.1} parent=31 // pred_region
          %s204 = smul.u32 16, %s16
          %p205 = scmp.lt.s32.totalorder %s204, 31
          %s206 = scalar_select %p205, %s204, 31
          %s207 = smul.addr %s206, 8
          %s208 = scalar_lea.vmem %s0, %s207
          %s209 = smul.u32 16, %s16
        $region36: #{tpu_custom_call.1} parent=31 // pred_fallthru
          _
      $region32: #{tpu_custom_call.1} parent=5 // pred_fallthru
        _
      %p210 = scmp.le.s32.totalorder 1, %s16
      %p211 = scmp.lt.s32.totalorder %s16, 3
      %p212 = pnand %p210, %p211
      %p213 = pneg %p212
      // Predicated region
      $region37: #{tpu_custom_call.1} parent=5 // pred_check
        _
      $region38: #{tpu_custom_call.1} parent=5 // pred_check_branch
        %215 = sbr.rel (%p212) target = $region40
      $region39: #{tpu_custom_call.1} parent=5 // pred_region
        %s216 = ssub.s32 %s16, 1
        // Predicated region
        $region41: #{tpu_custom_call.1} parent=39 // pred_check
          %p217 = pneg %p63
        $region42: #{tpu_custom_call.1} parent=39 // pred_check_branch
          %219 = sbr.rel (%p217) target = $region44
        $region43: #{tpu_custom_call.1} parent=39 // pred_region
          %220 = dma.done [#allocation3], 512
        $region44: #{tpu_custom_call.1} parent=39 // pred_fallthru
          _
        // Predicated region
        $region45: #{tpu_custom_call.1} parent=39 // pred_check
          %p221 = pneg %p126
        $region46: #{tpu_custom_call.1} parent=39 // pred_check_branch
          %223 = sbr.rel (%p221) target = $region48
        $region47: #{tpu_custom_call.1} parent=39 // pred_region
          %224 = dma.done [#allocation6], 2048
        $region48: #{tpu_custom_call.1} parent=39 // pred_fallthru
          _
        %s225 = smul.u32 16, %s21
        %p226 = scmp.lt.s32.totalorder %s225, 31
        %s227 = scalar_select %p226, %s225, 31
        %s228 = smul.addr %s227, 8
        %s229 = scalar_lea.vmem %s0, %s228
        %p230 = pneg %p42
        %p231 = pneg %p39
        %p232 = pneg %p63
        %p233 = pneg %p60
        %p234 = pneg %p84
        %p235 = pneg %p81
        %p236 = pneg %p105
        %p237 = pneg %p102
        %p238 = pneg %p126
        %p239 = pneg %p123
        %p240 = pneg %p152
        %p241 = pneg %p149
        %s242 = sand.u32 %s139, 1
        %s243 = scalar_lea.sflag [#allocation4], %s242
        %s244 = sand.u32 %s139, 1
        %s245 = smul.addr %s244, 128
        %s246 = scalar_lea.vmem [#allocation7], %s245
        %s247 = smul.u32 16, %s21
        %p248 = scmp.lt.s32.totalorder %s247, 31
        %s249 = scalar_select %p248, %s247, 31
        %s250 = smul.addr %s249, 8
        %s251 = scalar_lea.vmem %s0, %s250
        %s252 = smul.u32 16, %s21
        %s253 = smul.u32 16, %s21
        %v254 = vld [vmem:[%s251] sm:$0xff]
        %v255 = vld [vmem:[%s251 + $0x8] sm:$0xff]
        %v256 = vld [vmem:[%s251 + $0x10] sm:$0xff]
        %v257 = vld [vmem:[%s251 + $0x18] sm:$0xff]
        %v258 = vld [vmem:[%s251 + $0x20] sm:$0xff]
        %v259 = vld [vmem:[%s251 + $0x28] sm:$0xff]
        %v260 = vld [vmem:[%s251 + $0x30] sm:$0xff]
        %v261 = vld [vmem:[%s251 + $0x38] sm:$0xff]
        %v262 = vld [vmem:[%s251 + $0x40] sm:$0xff]
        %v263 = vld [vmem:[%s251 + $0x48] sm:$0xff]
        %v264 = vld [vmem:[%s251 + $0x50] sm:$0xff]
        %v265 = vld [vmem:[%s251 + $0x58] sm:$0xff]
        %v266 = vld [vmem:[%s251 + $0x60] sm:$0xff]
        %v267 = vld [vmem:[%s251 + $0x68] sm:$0xff]
        %v268 = vld [vmem:[%s251 + $0x70] sm:$0xff]
        %v269 = vld [vmem:[%s251 + $0x78] sm:$0xff]
        %v270 = vld [vmem:[#allocation2] sm:$0x1f]
        %v271 = vld [vmem:[#allocation2 + $0x8] sm:$0x1f]
        %v272 = vld [vmem:[#allocation2 + $0x10] sm:$0x1f]
        %v273 = vld [vmem:[#allocation2 + $0x18] sm:$0x1f]
        %vm274 = vcmask 39936
        %v276 = vsel %vm274, %v254, 0
        %v279 = vsel %vm274, %v255, 0
        %v282 = vsel %vm274, %v256, 0
        %v285 = vsel %vm274, %v257, 0
        %v288 = vsel %vm274, %v258, 0
        %v291 = vsel %vm274, %v259, 0
        %v294 = vsel %vm274, %v260, 0
        %v297 = vsel %vm274, %v261, 0
        %v300 = vsel %vm274, %v262, 0
        %v303 = vsel %vm274, %v263, 0
        %v306 = vsel %vm274, %v264, 0
        %v309 = vsel %vm274, %v265, 0
        %v312 = vsel %vm274, %v266, 0
        %v315 = vsel %vm274, %v267, 0
        %v318 = vsel %vm274, %v268, 0
        %v321 = vsel %vm274, %v269, 0
        %vm323 = vcmask 1044480
        %v325 = vsel %vm323, %v270, 0
        %v328 = vsel %vm323, %v271, 0
        %v331 = vsel %vm323, %v272, 0
        %v334 = vsel %vm323, %v273, 0
        %336 = vmatprep.subr.mxu0 %v328
        %337 = vmatpush1.msra.mxu0 %v325
        %338 = vmatprep.subr.mxu0 0.0
        %339 = vmatpush1.msra.mxu0 0.0
        %340 = vmatprep.subr.mxu0 0.0
        %341 = vmatpush1.msra.mxu0 0.0
        %342 = vmatprep.subr.mxu0 0.0
        %343 = vmatpush1.msra.mxu0 0.0
        %344 = vmatprep.subr.mxu0 0.0
        %345 = vmatpush1.msra.mxu0 0.0
        %346 = vmatprep.subr.mxu0 0.0
        %347 = vmatpush1.msra.mxu0 0.0
        %348 = vmatprep.subr.mxu0 0.0
        %349 = vmatpush1.msra.mxu0 0.0
        %350 = vmatprep.subr.mxu0 0.0
        %351 = vmatpush1.msra.mxu0 0.0
        %352 = vmatprep.subr.mxu0 0.0
        %353 = vmatpush1.msra.mxu0 0.0
        %354 = vmatprep.subr.mxu0 0.0
        %355 = vmatpush1.msra.mxu0 0.0
        %356 = vmatprep.subr.mxu0 0.0
        %357 = vmatpush1.msra.mxu0 0.0
        %358 = vmatprep.subr.mxu0 0.0
        %359 = vmatpush1.msra.mxu0 0.0
        %360 = vmatprep.subr.mxu0 0.0
        %361 = vmatpush1.msra.mxu0 0.0
        %362 = vmatprep.subr.mxu0 0.0
        %363 = vmatpush1.msra.mxu0 0.0
        %364 = vmatprep.subr.mxu0 0.0
        %365 = vmatpush1.msra.mxu0 0.0
        %366 = vmatprep.subr.mxu0 0.0
        %367 = vmatpush1.msra.mxu0 0.0
        %368 = vmatprep.subr.mxu0 0.0
        %369 = vmatpush1.msra.mxu0 0.0
        %370 = vmatprep.subr.mxu0 0.0
        %371 = vmatpush1.msra.mxu0 0.0
        %372 = vmatprep.subr.mxu0 0.0
        %373 = vmatpush1.msra.mxu0 0.0
        %374 = vmatprep.subr.mxu0 0.0
        %375 = vmatpush1.msra.mxu0 0.0
        %376 = vmatprep.subr.mxu0 0.0
        %377 = vmatpush1.msra.mxu0 0.0
        %378 = vmatprep.subr.mxu0 0.0
        %379 = vmatpush1.msra.mxu0 0.0
        %380 = vmatprep.subr.mxu0 0.0
        %381 = vmatpush1.msra.mxu0 0.0
        %382 = vmatprep.subr.mxu0 0.0
        %383 = vmatpush1.msra.mxu0 0.0
        %384 = vmatprep.subr.mxu0 0.0
        %385 = vmatpush1.msra.mxu0 0.0
        %386 = vmatprep.subr.mxu0 0.0
        %387 = vmatpush1.msra.mxu0 0.0
        %388 = vmatprep.subr.mxu0 0.0
        %389 = vmatpush1.msra.mxu0 0.0
        %390 = vmatprep.subr.mxu0 0.0
        %391 = vmatpush1.msra.mxu0 0.0
        %392 = vmatprep.subr.mxu0 0.0
        %393 = vmatpush1.msra.mxu0 0.0
        %394 = vmatprep.subr.mxu0 0.0
        %395 = vmatpush1.msra.mxu0 0.0
        %396 = vmatprep.subr.mxu0 0.0
        %397 = vmatpush1.msra.mxu0 0.0
        %398 = vmatprep.subr.mxu0 0.0
        %399 = vmatpush1.msra.mxu0 0.0
        %400 = vmatprep.mubr.f32.mxu0 0.0
        %401 = vmatmul.mubr.f32.gmra.mrb[0].mxu0 %v276
        %v402 = vpop.f32.mrb[0].mxu0
        %v403 = vadd.f32 0.0, %v402
        %v404 = vpop.f32.mrb[0].mxu0
        %v405 = vadd.f32 0.0, %v404
        %406 = vmatprep.mubr.f32.mxu0 0.0
        %407 = vmatmul.mubr.f32.gmra.mrb[0].mxu0 %v279
        %v408 = vpop.f32.mrb[0].mxu0
        %v409 = vadd.f32 0.0, %v408
        %v410 = vpop.f32.mrb[0].mxu0
        %v411 = vadd.f32 0.0, %v410
        %412 = vmatprep.mubr.f32.mxu0 0.0
        %413 = vmatmul.mubr.f32.gmra.mrb[0].mxu0 %v282
        %v414 = vpop.f32.mrb[0].mxu0
        %v415 = vadd.f32 0.0, %v414
        %v416 = vpop.f32.mrb[0].mxu0
        %v417 = vadd.f32 0.0, %v416
        %418 = vmatprep.mubr.f32.mxu0 0.0
        %419 = vmatmul.mubr.f32.gmra.mrb[0].mxu0 %v285
        %v420 = vpop.f32.mrb[0].mxu0
        %v421 = vadd.f32 0.0, %v420
        %v422 = vpop.f32.mrb[0].mxu0
        %v423 = vadd.f32 0.0, %v422
        %424 = vmatprep.mubr.f32.mxu0 0.0
        %425 = vmatmul.mubr.f32.gmra.mrb[0].mxu0 %v288
        %v426 = vpop.f32.mrb[0].mxu0
        %v427 = vadd.f32 0.0, %v426
        %v428 = vpop.f32.mrb[0].mxu0
        %v429 = vadd.f32 0.0, %v428
        %430 = vmatprep.mubr.f32.mxu0 0.0
        %431 = vmatmul.mubr.f32.gmra.mrb[0].mxu0 %v291
        %v432 = vpop.f32.mrb[0].mxu0
        %v433 = vadd.f32 0.0, %v432
        %v434 = vpop.f32.mrb[0].mxu0
        %v435 = vadd.f32 0.0, %v434
        %436 = vmatprep.mubr.f32.mxu0 0.0
        %437 = vmatmul.mubr.f32.gmra.mrb[0].mxu0 %v294
        %v438 = vpop.f32.mrb[0].mxu0
        %v439 = vadd.f32 0.0, %v438
        %v440 = vpop.f32.mrb[0].mxu0
        %v441 = vadd.f32 0.0, %v440
        %442 = vmatprep.mubr.f32.mxu0 0.0
        %443 = vmatmul.mubr.f32.gmra.mrb[0].mxu0 %v297
        %v444 = vpop.f32.mrb[0].mxu0
        %v445 = vadd.f32 0.0, %v444
        %v446 = vpop.f32.mrb[0].mxu0
        %v447 = vadd.f32 0.0, %v446
        %448 = vmatprep.mubr.f32.mxu0 0.0
        %449 = vmatmul.mubr.f32.gmra.mrb[0].mxu0 %v300
        %v450 = vpop.f32.mrb[0].mxu0
        %v451 = vadd.f32 0.0, %v450
        %v452 = vpop.f32.mrb[0].mxu0
        %v453 = vadd.f32 0.0, %v452
        %454 = vmatprep.mubr.f32.mxu0 0.0
        %455 = vmatmul.mubr.f32.gmra.mrb[0].mxu0 %v303
        %v456 = vpop.f32.mrb[0].mxu0
        %v457 = vadd.f32 0.0, %v456
        %v458 = vpop.f32.mrb[0].mxu0
        %v459 = vadd.f32 0.0, %v458
        %460 = vmatprep.mubr.f32.mxu0 0.0
        %461 = vmatmul.mubr.f32.gmra.mrb[0].mxu0 %v306
        %v462 = vpop.f32.mrb[0].mxu0
        %v463 = vadd.f32 0.0, %v462
        %v464 = vpop.f32.mrb[0].mxu0
        %v465 = vadd.f32 0.0, %v464
        %466 = vmatprep.mubr.f32.mxu0 0.0
        %467 = vmatmul.mubr.f32.gmra.mrb[0].mxu0 %v309
        %v468 = vpop.f32.mrb[0].mxu0
        %v469 = vadd.f32 0.0, %v468
        %v470 = vpop.f32.mrb[0].mxu0
        %v471 = vadd.f32 0.0, %v470
        %472 = vmatprep.mubr.f32.mxu0 0.0
        %473 = vmatmul.mubr.f32.gmra.mrb[0].mxu0 %v312
        %v474 = vpop.f32.mrb[0].mxu0
        %v475 = vadd.f32 0.0, %v474
        %v476 = vpop.f32.mrb[0].mxu0
        %v477 = vadd.f32 0.0, %v476
        %478 = vmatprep.mubr.f32.mxu0 0.0
        %479 = vmatmul.mubr.f32.gmra.mrb[0].mxu0 %v315
        %v480 = vpop.f32.mrb[0].mxu0
        %v481 = vadd.f32 0.0, %v480
        %v482 = vpop.f32.mrb[0].mxu0
        %v483 = vadd.f32 0.0, %v482
        %484 = vmatprep.mubr.f32.mxu0 0.0
        %485 = vmatmul.mubr.f32.gmra.mrb[0].mxu0 %v318
        %v486 = vpop.f32.mrb[0].mxu0
        %v487 = vadd.f32 0.0, %v486
        %v488 = vpop.f32.mrb[0].mxu0
        %v489 = vadd.f32 0.0, %v488
        %490 = vmatprep.mubr.f32.mxu0 0.0
        %491 = vmatmul.mubr.f32.gmra.mrb[0].mxu0 %v321
        %v492 = vpop.f32.mrb[0].mxu0
        %v493 = vadd.f32 0.0, %v492
        %v494 = vpop.f32.mrb[0].mxu0
        %v495 = vadd.f32 0.0, %v494
        %496 = vdwg.mxu0
        %497 = vmatprep.subr.mxu0 %v334
        %498 = vmatpush1.msra.mxu0 %v331
        %499 = vmatprep.subr.mxu0 0.0
        %500 = vmatpush1.msra.mxu0 0.0
        %501 = vmatprep.subr.mxu0 0.0
        %502 = vmatpush1.msra.mxu0 0.0
        %503 = vmatprep.subr.mxu0 0.0
        %504 = vmatpush1.msra.mxu0 0.0
        %505 = vmatprep.subr.mxu0 0.0
        %506 = vmatpush1.msra.mxu0 0.0
        %507 = vmatprep.subr.mxu0 0.0
        %508 = vmatpush1.msra.mxu0 0.0
        %509 = vmatprep.subr.mxu0 0.0
        %510 = vmatpush1.msra.mxu0 0.0
        %511 = vmatprep.subr.mxu0 0.0
        %512 = vmatpush1.msra.mxu0 0.0
        %513 = vmatprep.subr.mxu0 0.0
        %514 = vmatpush1.msra.mxu0 0.0
        %515 = vmatprep.subr.mxu0 0.0
        %516 = vmatpush1.msra.mxu0 0.0
        %517 = vmatprep.subr.mxu0 0.0
        %518 = vmatpush1.msra.mxu0 0.0
        %519 = vmatprep.subr.mxu0 0.0
        %520 = vmatpush1.msra.mxu0 0.0
        %521 = vmatprep.subr.mxu0 0.0
        %522 = vmatpush1.msra.mxu0 0.0
        %523 = vmatprep.subr.mxu0 0.0
        %524 = vmatpush1.msra.mxu0 0.0
        %525 = vmatprep.subr.mxu0 0.0
        %526 = vmatpush1.msra.mxu0 0.0
        %527 = vmatprep.subr.mxu0 0.0
        %528 = vmatpush1.msra.mxu0 0.0
        %529 = vmatprep.subr.mxu0 0.0
        %530 = vmatpush1.msra.mxu0 0.0
        %531 = vmatprep.subr.mxu0 0.0
        %532 = vmatpush1.msra.mxu0 0.0
        %533 = vmatprep.subr.mxu0 0.0
        %534 = vmatpush1.msra.mxu0 0.0
        %535 = vmatprep.subr.mxu0 0.0
        %536 = vmatpush1.msra.mxu0 0.0
        %537 = vmatprep.subr.mxu0 0.0
        %538 = vmatpush1.msra.mxu0 0.0
        %539 = vmatprep.subr.mxu0 0.0
        %540 = vmatpush1.msra.mxu0 0.0
        %541 = vmatprep.subr.mxu0 0.0
        %542 = vmatpush1.msra.mxu0 0.0
        %543 = vmatprep.subr.mxu0 0.0
        %544 = vmatpush1.msra.mxu0 0.0
        %545 = vmatprep.subr.mxu0 0.0
        %546 = vmatpush1.msra.mxu0 0.0
        %547 = vmatprep.subr.mxu0 0.0
        %548 = vmatpush1.msra.mxu0 0.0
        %549 = vmatprep.subr.mxu0 0.0
        %550 = vmatpush1.msra.mxu0 0.0
        %551 = vmatprep.subr.mxu0 0.0
        %552 = vmatpush1.msra.mxu0 0.0
        %553 = vmatprep.subr.mxu0 0.0
        %554 = vmatpush1.msra.mxu0 0.0
        %555 = vmatprep.subr.mxu0 0.0
        %556 = vmatpush1.msra.mxu0 0.0
        %557 = vmatprep.subr.mxu0 0.0
        %558 = vmatpush1.msra.mxu0 0.0
        %559 = vmatprep.subr.mxu0 0.0
        %560 = vmatpush1.msra.mxu0 0.0
        %561 = vmatprep.mubr.f32.mxu0 0.0
        %562 = vmatmul.mubr.f32.gmra.mrb[0].mxu0 %v276
        %v563 = vpop.f32.mrb[0].mxu0
        %v564 = vadd.f32 0.0, %v563
        %v565 = vpop.f32.mrb[0].mxu0
        %v566 = vadd.f32 0.0, %v565
        %567 = vmatprep.mubr.f32.mxu0 0.0
        %568 = vmatmul.mubr.f32.gmra.mrb[0].mxu0 %v279
        %v569 = vpop.f32.mrb[0].mxu0
        %v570 = vadd.f32 0.0, %v569
        %v571 = vpop.f32.mrb[0].mxu0
        %v572 = vadd.f32 0.0, %v571
        %573 = vmatprep.mubr.f32.mxu0 0.0
        %574 = vmatmul.mubr.f32.gmra.mrb[0].mxu0 %v282
        %v575 = vpop.f32.mrb[0].mxu0
        %v576 = vadd.f32 0.0, %v575
        %v577 = vpop.f32.mrb[0].mxu0
        %v578 = vadd.f32 0.0, %v577
        %579 = vmatprep.mubr.f32.mxu0 0.0
        %580 = vmatmul.mubr.f32.gmra.mrb[0].mxu0 %v285
        %v581 = vpop.f32.mrb[0].mxu0
        %v582 = vadd.f32 0.0, %v581
        %v583 = vpop.f32.mrb[0].mxu0
        %v584 = vadd.f32 0.0, %v583
        %585 = vmatprep.mubr.f32.mxu0 0.0
        %586 = vmatmul.mubr.f32.gmra.mrb[0].mxu0 %v288
        %v587 = vpop.f32.mrb[0].mxu0
        %v588 = vadd.f32 0.0, %v587
        %v589 = vpop.f32.mrb[0].mxu0
        %v590 = vadd.f32 0.0, %v589
        %591 = vmatprep.mubr.f32.mxu0 0.0
        %592 = vmatmul.mubr.f32.gmra.mrb[0].mxu0 %v291
        %v593 = vpop.f32.mrb[0].mxu0
        %v594 = vadd.f32 0.0, %v593
        %v595 = vpop.f32.mrb[0].mxu0
        %v596 = vadd.f32 0.0, %v595
        %597 = vmatprep.mubr.f32.mxu0 0.0
        %598 = vmatmul.mubr.f32.gmra.mrb[0].mxu0 %v294
        %v599 = vpop.f32.mrb[0].mxu0
        %v600 = vadd.f32 0.0, %v599
        %v601 = vpop.f32.mrb[0].mxu0
        %v602 = vadd.f32 0.0, %v601
        %603 = vmatprep.mubr.f32.mxu0 0.0
        %604 = vmatmul.mubr.f32.gmra.mrb[0].mxu0 %v297
        %v605 = vpop.f32.mrb[0].mxu0
        %v606 = vadd.f32 0.0, %v605
        %v607 = vpop.f32.mrb[0].mxu0
        %v608 = vadd.f32 0.0, %v607
        %609 = vmatprep.mubr.f32.mxu0 0.0
        %610 = vmatmul.mubr.f32.gmra.mrb[0].mxu0 %v300
        %v611 = vpop.f32.mrb[0].mxu0
        %v612 = vadd.f32 0.0, %v611
        %v613 = vpop.f32.mrb[0].mxu0
        %v614 = vadd.f32 0.0, %v613
        %615 = vmatprep.mubr.f32.mxu0 0.0
        %616 = vmatmul.mubr.f32.gmra.mrb[0].mxu0 %v303
        %v617 = vpop.f32.mrb[0].mxu0
        %v618 = vadd.f32 0.0, %v617
        %v619 = vpop.f32.mrb[0].mxu0
        %v620 = vadd.f32 0.0, %v619
        %621 = vmatprep.mubr.f32.mxu0 0.0
        %622 = vmatmul.mubr.f32.gmra.mrb[0].mxu0 %v306
        %v623 = vpop.f32.mrb[0].mxu0
        %v624 = vadd.f32 0.0, %v623
        %v625 = vpop.f32.mrb[0].mxu0
        %v626 = vadd.f32 0.0, %v625
        %627 = vmatprep.mubr.f32.mxu0 0.0
        %628 = vmatmul.mubr.f32.gmra.mrb[0].mxu0 %v309
        %v629 = vpop.f32.mrb[0].mxu0
        %v630 = vadd.f32 0.0, %v629
        %v631 = vpop.f32.mrb[0].mxu0
        %v632 = vadd.f32 0.0, %v631
        %633 = vmatprep.mubr.f32.mxu0 0.0
        %634 = vmatmul.mubr.f32.gmra.mrb[0].mxu0 %v312
        %v635 = vpop.f32.mrb[0].mxu0
        %v636 = vadd.f32 0.0, %v635
        %v637 = vpop.f32.mrb[0].mxu0
        %v638 = vadd.f32 0.0, %v637
        %639 = vmatprep.mubr.f32.mxu0 0.0
        %640 = vmatmul.mubr.f32.gmra.mrb[0].mxu0 %v315
        %v641 = vpop.f32.mrb[0].mxu0
        %v642 = vadd.f32 0.0, %v641
        %v643 = vpop.f32.mrb[0].mxu0
        %v644 = vadd.f32 0.0, %v643
        %645 = vmatprep.mubr.f32.mxu0 0.0
        %646 = vmatmul.mubr.f32.gmra.mrb[0].mxu0 %v318
        %v647 = vpop.f32.mrb[0].mxu0
        %v648 = vadd.f32 0.0, %v647
        %v649 = vpop.f32.mrb[0].mxu0
        %v650 = vadd.f32 0.0, %v649
        %651 = vmatprep.mubr.f32.mxu0 0.0
        %652 = vmatmul.mubr.f32.gmra.mrb[0].mxu0 %v321
        %v653 = vpop.f32.mrb[0].mxu0
        %v654 = vadd.f32 0.0, %v653
        %v655 = vpop.f32.mrb[0].mxu0
        %v656 = vadd.f32 0.0, %v655
        %657 = vdwg.mxu0
        %vm658 = vcmp.gt.f32.partialorder %v403, 20.0
        %vm659 = vcmp.gt.f32.partialorder %v409, 20.0
        %vm660 = vcmp.gt.f32.partialorder %v415, 20.0
        %vm661 = vcmp.gt.f32.partialorder %v421, 20.0
        %vm662 = vcmp.gt.f32.partialorder %v427, 20.0
        %vm663 = vcmp.gt.f32.partialorder %v433, 20.0
        %vm664 = vcmp.gt.f32.partialorder %v439, 20.0
        %vm665 = vcmp.gt.f32.partialorder %v445, 20.0
        %vm666 = vcmp.gt.f32.partialorder %v451, 20.0
        %vm667 = vcmp.gt.f32.partialorder %v457, 20.0
        %vm668 = vcmp.gt.f32.partialorder %v463, 20.0
        %vm669 = vcmp.gt.f32.partialorder %v469, 20.0
        %vm670 = vcmp.gt.f32.partialorder %v475, 20.0
        %vm671 = vcmp.gt.f32.partialorder %v481, 20.0
        %vm672 = vcmp.gt.f32.partialorder %v487, 20.0
        %vm673 = vcmp.gt.f32.partialorder %v493, 20.0
        %v674 = vmul.f32 %v403, 1.442695
        %v675 = vpow.pop %v674
        %v676 = vmul.f32 %v409, 1.442695
        %v677 = vpow.pop %v676
        %v678 = vmul.f32 %v415, 1.442695
        %v679 = vpow.pop %v678
        %v680 = vmul.f32 %v421, 1.442695
        %v681 = vpow.pop %v680
        %v682 = vmul.f32 %v427, 1.442695
        %v683 = vpow.pop %v682
        %v684 = vmul.f32 %v433, 1.442695
        %v685 = vpow.pop %v684
        %v686 = vmul.f32 %v439, 1.442695
        %v687 = vpow.pop %v686
        %v688 = vmul.f32 %v445, 1.442695
        %v689 = vpow.pop %v688
        %v690 = vmul.f32 %v451, 1.442695
        %v691 = vpow.pop %v690
        %v692 = vmul.f32 %v457, 1.442695
        %v693 = vpow.pop %v692
        %v694 = vmul.f32 %v463, 1.442695
        %v695 = vpow.pop %v694
        %v696 = vmul.f32 %v469, 1.442695
        %v697 = vpow.pop %v696
        %v698 = vmul.f32 %v475, 1.442695
        %v699 = vpow.pop %v698
        %v700 = vmul.f32 %v481, 1.442695
        %v701 = vpow.pop %v700
        %v702 = vmul.f32 %v487, 1.442695
        %v703 = vpow.pop %v702
        %v704 = vmul.f32 %v493, 1.442695
        %v705 = vpow.pop %v704
        %v706 = vadd.f32 %v675, 1.0
        %v707 = vlog2.pop %v706
        %v708 = vmul.f32 %v707, 0.6931472
        %v709 = vmul.f32 -0.5, %v675
        %v710 = vadd.f32 %v709, 1.0
        %v711 = vmul.f32 %v710, %v675
        %v712 = vand.u32 2147483647, %v675
        %vm713 = vcmp.lt.f32.partialorder %v712, 0.0004427343
        %v714 = vsel %vm713, %v711, %v708
        %v715 = vadd.f32 %v677, 1.0
        %v716 = vlog2.pop %v715
        %v717 = vmul.f32 %v716, 0.6931472
        %v718 = vmul.f32 -0.5, %v677
        %v719 = vadd.f32 %v718, 1.0
        %v720 = vmul.f32 %v719, %v677
        %v721 = vand.u32 2147483647, %v677
        %vm722 = vcmp.lt.f32.partialorder %v721, 0.0004427343
        %v723 = vsel %vm722, %v720, %v717
        %v724 = vadd.f32 %v679, 1.0
        %v725 = vlog2.pop %v724
        %v726 = vmul.f32 %v725, 0.6931472
        %v727 = vmul.f32 -0.5, %v679
        %v728 = vadd.f32 %v727, 1.0
        %v729 = vmul.f32 %v728, %v679
        %v730 = vand.u32 2147483647, %v679
        %vm731 = vcmp.lt.f32.partialorder %v730, 0.0004427343
        %v732 = vsel %vm731, %v729, %v726
        %v733 = vadd.f32 %v681, 1.0
        %v734 = vlog2.pop %v733
        %v735 = vmul.f32 %v734, 0.6931472
        %v736 = vmul.f32 -0.5, %v681
        %v737 = vadd.f32 %v736, 1.0
        %v738 = vmul.f32 %v737, %v681
        %v739 = vand.u32 2147483647, %v681
        %vm740 = vcmp.lt.f32.partialorder %v739, 0.0004427343
        %v741 = vsel %vm740, %v738, %v735
        %v742 = vadd.f32 %v683, 1.0
        %v743 = vlog2.pop %v742
        %v744 = vmul.f32 %v743, 0.6931472
        %v745 = vmul.f32 -0.5, %v683
        %v746 = vadd.f32 %v745, 1.0
        %v747 = vmul.f32 %v746, %v683
        %v748 = vand.u32 2147483647, %v683
        %vm749 = vcmp.lt.f32.partialorder %v748, 0.0004427343
        %v750 = vsel %vm749, %v747, %v744
        %v751 = vadd.f32 %v685, 1.0
        %v752 = vlog2.pop %v751
        %v753 = vmul.f32 %v752, 0.6931472
        %v754 = vmul.f32 -0.5, %v685
        %v755 = vadd.f32 %v754, 1.0
        %v756 = vmul.f32 %v755, %v685
        %v757 = vand.u32 2147483647, %v685
        %vm758 = vcmp.lt.f32.partialorder %v757, 0.0004427343
        %v759 = vsel %vm758, %v756, %v753
        %v760 = vadd.f32 %v687, 1.0
        %v761 = vlog2.pop %v760
        %v762 = vmul.f32 %v761, 0.6931472
        %v763 = vmul.f32 -0.5, %v687
        %v764 = vadd.f32 %v763, 1.0
        %v765 = vmul.f32 %v764, %v687
        %v766 = vand.u32 2147483647, %v687
        %vm767 = vcmp.lt.f32.partialorder %v766, 0.0004427343
        %v768 = vsel %vm767, %v765, %v762
        %v769 = vadd.f32 %v689, 1.0
        %v770 = vlog2.pop %v769
        %v771 = vmul.f32 %v770, 0.6931472
        %v772 = vmul.f32 -0.5, %v689
        %v773 = vadd.f32 %v772, 1.0
        %v774 = vmul.f32 %v773, %v689
        %v775 = vand.u32 2147483647, %v689
        %vm776 = vcmp.lt.f32.partialorder %v775, 0.0004427343
        %v777 = vsel %vm776, %v774, %v771
        %v778 = vadd.f32 %v691, 1.0
        %v779 = vlog2.pop %v778
        %v780 = vmul.f32 %v779, 0.6931472
        %v781 = vmul.f32 -0.5, %v691
        %v782 = vadd.f32 %v781, 1.0
        %v783 = vmul.f32 %v782, %v691
        %v784 = vand.u32 2147483647, %v691
        %vm785 = vcmp.lt.f32.partialorder %v784, 0.0004427343
        %v786 = vsel %vm785, %v783, %v780
        %v787 = vadd.f32 %v693, 1.0
        %v788 = vlog2.pop %v787
        %v789 = vmul.f32 %v788, 0.6931472
        %v790 = vmul.f32 -0.5, %v693
        %v791 = vadd.f32 %v790, 1.0
        %v792 = vmul.f32 %v791, %v693
        %v793 = vand.u32 2147483647, %v693
        %vm794 = vcmp.lt.f32.partialorder %v793, 0.0004427343
        %v795 = vsel %vm794, %v792, %v789
        %v796 = vadd.f32 %v695, 1.0
        %v797 = vlog2.pop %v796
        %v798 = vmul.f32 %v797, 0.6931472
        %v799 = vmul.f32 -0.5, %v695
        %v800 = vadd.f32 %v799, 1.0
        %v801 = vmul.f32 %v800, %v695
        %v802 = vand.u32 2147483647, %v695
        %vm803 = vcmp.lt.f32.partialorder %v802, 0.0004427343
        %v804 = vsel %vm803, %v801, %v798
        %v805 = vadd.f32 %v697, 1.0
        %v806 = vlog2.pop %v805
        %v807 = vmul.f32 %v806, 0.6931472
        %v808 = vmul.f32 -0.5, %v697
        %v809 = vadd.f32 %v808, 1.0
        %v810 = vmul.f32 %v809, %v697
        %v811 = vand.u32 2147483647, %v697
        %vm812 = vcmp.lt.f32.partialorder %v811, 0.0004427343
        %v813 = vsel %vm812, %v810, %v807
        %v814 = vadd.f32 %v699, 1.0
        %v815 = vlog2.pop %v814
        %v816 = vmul.f32 %v815, 0.6931472
        %v817 = vmul.f32 -0.5, %v699
        %v818 = vadd.f32 %v817, 1.0
        %v819 = vmul.f32 %v818, %v699
        %v820 = vand.u32 2147483647, %v699
        %vm821 = vcmp.lt.f32.partialorder %v820, 0.0004427343
        %v822 = vsel %vm821, %v819, %v816
        %v823 = vadd.f32 %v701, 1.0
        %v824 = vlog2.pop %v823
        %v825 = vmul.f32 %v824, 0.6931472
        %v826 = vmul.f32 -0.5, %v701
        %v827 = vadd.f32 %v826, 1.0
        %v828 = vmul.f32 %v827, %v701
        %v829 = vand.u32 2147483647, %v701
        %vm830 = vcmp.lt.f32.partialorder %v829, 0.0004427343
        %v831 = vsel %vm830, %v828, %v825
        %v832 = vadd.f32 %v703, 1.0
        %v833 = vlog2.pop %v832
        %v834 = vmul.f32 %v833, 0.6931472
        %v835 = vmul.f32 -0.5, %v703
        %v836 = vadd.f32 %v835, 1.0
        %v837 = vmul.f32 %v836, %v703
        %v838 = vand.u32 2147483647, %v703
        %vm839 = vcmp.lt.f32.partialorder %v838, 0.0004427343
        %v840 = vsel %vm839, %v837, %v834
        %v841 = vadd.f32 %v705, 1.0
        %v842 = vlog2.pop %v841
        %v843 = vmul.f32 %v842, 0.6931472
        %v844 = vmul.f32 -0.5, %v705
        %v845 = vadd.f32 %v844, 1.0
        %v846 = vmul.f32 %v845, %v705
        %v847 = vand.u32 2147483647, %v705
        %vm848 = vcmp.lt.f32.partialorder %v847, 0.0004427343
        %v849 = vsel %vm848, %v846, %v843
        %v850 = vsel %vm658, %v403, %v714
        %v851 = vsel %vm659, %v409, %v723
        %v852 = vsel %vm660, %v415, %v732
        %v853 = vsel %vm661, %v421, %v741
        %v854 = vsel %vm662, %v427, %v750
        %v855 = vsel %vm663, %v433, %v759
        %v856 = vsel %vm664, %v439, %v768
        %v857 = vsel %vm665, %v445, %v777
        %v858 = vsel %vm666, %v451, %v786
        %v859 = vsel %vm667, %v457, %v795
        %v860 = vsel %vm668, %v463, %v804
        %v861 = vsel %vm669, %v469, %v813
        %v862 = vsel %vm670, %v475, %v822
        %v863 = vsel %vm671, %v481, %v831
        %v864 = vsel %vm672, %v487, %v840
        %v865 = vsel %vm673, %v493, %v849
        %v866 = vld [vmem:[%s2] sm:$0xff]
        %v867 = vld [vmem:[%s2 + $0x8] sm:$0xff]
        %v868 = vld [vmem:[%s2 + $0x10] sm:$0xff]
        %v869 = vld [vmem:[%s2 + $0x18] sm:$0xff]
        %v870 = vld [vmem:[%s2 + $0x20] sm:$0xff]
        %v871 = vld [vmem:[%s2 + $0x28] sm:$0xff]
        %v872 = vld [vmem:[%s2 + $0x30] sm:$0xff]
        %v873 = vld [vmem:[%s2 + $0x38] sm:$0xff]
        %v874 = vld [vmem:[%s2 + $0x40] sm:$0xff]
        %v875 = vld [vmem:[%s2 + $0x48] sm:$0xff]
        %v876 = vld [vmem:[%s2 + $0x50] sm:$0xff]
        %v877 = vld [vmem:[%s2 + $0x58] sm:$0xff]
        %v878 = vld [vmem:[%s2 + $0x60] sm:$0xff]
        %v879 = vld [vmem:[%s2 + $0x68] sm:$0xff]
        %v880 = vld [vmem:[%s2 + $0x70] sm:$0xff]
        %v881 = vld [vmem:[%s2 + $0x78] sm:$0xff]
        %882 = vmatprep.subr.mxu0 0.0
        %883 = vmatpush1.msra.mxu0 %v866
        %884 = vmatprep.subr.mxu0 0.0
        %885 = vmatpush1.msra.mxu0 %v867
        %886 = vmatprep.subr.mxu0 0.0
        %887 = vmatpush1.msra.mxu0 %v868
        %888 = vmatprep.subr.mxu0 0.0
        %889 = vmatpush1.msra.mxu0 %v869
        %890 = vmatprep.subr.mxu0 0.0
        %891 = vmatpush1.msra.mxu0 %v870
        %892 = vmatprep.subr.mxu0 0.0
        %893 = vmatpush1.msra.mxu0 %v871
        %894 = vmatprep.subr.mxu0 0.0
        %895 = vmatpush1.msra.mxu0 %v872
        %896 = vmatprep.subr.mxu0 0.0
        %897 = vmatpush1.msra.mxu0 %v873
        %898 = vmatprep.subr.mxu0 0.0
        %899 = vmatpush1.msra.mxu0 %v874
        %900 = vmatprep.subr.mxu0 0.0
        %901 = vmatpush1.msra.mxu0 %v875
        %902 = vmatprep.subr.mxu0 0.0
        %903 = vmatpush1.msra.mxu0 %v876
        %904 = vmatprep.subr.mxu0 0.0
        %905 = vmatpush1.msra.mxu0 %v877
        %906 = vmatprep.subr.mxu0 0.0
        %907 = vmatpush1.msra.mxu0 %v878
        %908 = vmatprep.subr.mxu0 0.0
        %909 = vmatpush1.msra.mxu0 %v879
        %910 = vmatprep.subr.mxu0 0.0
        %911 = vmatpush1.msra.mxu0 %v880
        %912 = vmatprep.subr.mxu0 0.0
        %913 = vmatpush1.msra.mxu0 %v881
        %914 = vmatprep.subr.mxu0 0.0
        %915 = vmatpush1.msra.mxu0 0.0
        %916 = vmatprep.subr.mxu0 0.0
        %917 = vmatpush1.msra.mxu0 0.0
        %918 = vmatprep.subr.mxu0 0.0
        %919 = vmatpush1.msra.mxu0 0.0
        %920 = vmatprep.subr.mxu0 0.0
        %921 = vmatpush1.msra.mxu0 0.0
        %922 = vmatprep.subr.mxu0 0.0
        %923 = vmatpush1.msra.mxu0 0.0
        %924 = vmatprep.subr.mxu0 0.0
        %925 = vmatpush1.msra.mxu0 0.0
        %926 = vmatprep.subr.mxu0 0.0
        %927 = vmatpush1.msra.mxu0 0.0
        %928 = vmatprep.subr.mxu0 0.0
        %929 = vmatpush1.msra.mxu0 0.0
        %930 = vmatprep.subr.mxu0 0.0
        %931 = vmatpush1.msra.mxu0 0.0
        %932 = vmatprep.subr.mxu0 0.0
        %933 = vmatpush1.msra.mxu0 0.0
        %934 = vmatprep.subr.mxu0 0.0
        %935 = vmatpush1.msra.mxu0 0.0
        %936 = vmatprep.subr.mxu0 0.0
        %937 = vmatpush1.msra.mxu0 0.0
        %938 = vmatprep.subr.mxu0 0.0
        %939 = vmatpush1.msra.mxu0 0.0
        %940 = vmatprep.subr.mxu0 0.0
        %941 = vmatpush1.msra.mxu0 0.0
        %942 = vmatprep.subr.mxu0 0.0
        %943 = vmatpush1.msra.mxu0 0.0
        %944 = vmatprep.subr.mxu0 0.0
        %945 = vmatpush1.msra.mxu0 0.0
        %946 = vmatprep.mubr.f32.mxu0 0.0
        %947 = vmatmul.mubr.f32.gmra.mrb[0].mxu0 %v850
        %v948 = vpop.f32.mrb[0].mxu0
        %v949 = vadd.f32 %v405, %v948
        %v950 = vpop.f32.mrb[0].mxu0
        %951 = vmatprep.mubr.f32.mxu0 0.0
        %952 = vmatmul.mubr.f32.gmra.mrb[0].mxu0 %v851
        %v953 = vpop.f32.mrb[0].mxu0
        %v954 = vadd.f32 %v411, %v953
        %v955 = vpop.f32.mrb[0].mxu0
        %956 = vmatprep.mubr.f32.mxu0 0.0
        %957 = vmatmul.mubr.f32.gmra.mrb[0].mxu0 %v852
        %v958 = vpop.f32.mrb[0].mxu0
        %v959 = vadd.f32 %v417, %v958
        %v960 = vpop.f32.mrb[0].mxu0
        %961 = vmatprep.mubr.f32.mxu0 0.0
        %962 = vmatmul.mubr.f32.gmra.mrb[0].mxu0 %v853
        %v963 = vpop.f32.mrb[0].mxu0
        %v964 = vadd.f32 %v423, %v963
        %v965 = vpop.f32.mrb[0].mxu0
        %966 = vmatprep.mubr.f32.mxu0 0.0
        %967 = vmatmul.mubr.f32.gmra.mrb[0].mxu0 %v854
        %v968 = vpop.f32.mrb[0].mxu0
        %v969 = vadd.f32 %v429, %v968
        %v970 = vpop.f32.mrb[0].mxu0
        %971 = vmatprep.mubr.f32.mxu0 0.0
        %972 = vmatmul.mubr.f32.gmra.mrb[0].mxu0 %v855
        %v973 = vpop.f32.mrb[0].mxu0
        %v974 = vadd.f32 %v435, %v973
        %v975 = vpop.f32.mrb[0].mxu0
        %976 = vmatprep.mubr.f32.mxu0 0.0
        %977 = vmatmul.mubr.f32.gmra.mrb[0].mxu0 %v856
        %v978 = vpop.f32.mrb[0].mxu0
        %v979 = vadd.f32 %v441, %v978
        %v980 = vpop.f32.mrb[0].mxu0
        %981 = vmatprep.mubr.f32.mxu0 0.0
        %982 = vmatmul.mubr.f32.gmra.mrb[0].mxu0 %v857
        %v983 = vpop.f32.mrb[0].mxu0
        %v984 = vadd.f32 %v447, %v983
        %v985 = vpop.f32.mrb[0].mxu0
        %986 = vmatprep.mubr.f32.mxu0 0.0
        %987 = vmatmul.mubr.f32.gmra.mrb[0].mxu0 %v858
        %v988 = vpop.f32.mrb[0].mxu0
        %v989 = vadd.f32 %v453, %v988
        %v990 = vpop.f32.mrb[0].mxu0
        %991 = vmatprep.mubr.f32.mxu0 0.0
        %992 = vmatmul.mubr.f32.gmra.mrb[0].mxu0 %v859
        %v993 = vpop.f32.mrb[0].mxu0
        %v994 = vadd.f32 %v459, %v993
        %v995 = vpop.f32.mrb[0].mxu0
        %996 = vmatprep.mubr.f32.mxu0 0.0
        %997 = vmatmul.mubr.f32.gmra.mrb[0].mxu0 %v860
        %v998 = vpop.f32.mrb[0].mxu0
        %v999 = vadd.f32 %v465, %v998
        %v1000 = vpop.f32.mrb[0].mxu0
        %1001 = vmatprep.mubr.f32.mxu0 0.0
        %1002 = vmatmul.mubr.f32.gmra.mrb[0].mxu0 %v861
        %v1003 = vpop.f32.mrb[0].mxu0
        %v1004 = vadd.f32 %v471, %v1003
        %v1005 = vpop.f32.mrb[0].mxu0
        %1006 = vmatprep.mubr.f32.mxu0 0.0
        %1007 = vmatmul.mubr.f32.gmra.mrb[0].mxu0 %v862
        %v1008 = vpop.f32.mrb[0].mxu0
        %v1009 = vadd.f32 %v477, %v1008
        %v1010 = vpop.f32.mrb[0].mxu0
        %1011 = vmatprep.mubr.f32.mxu0 0.0
        %1012 = vmatmul.mubr.f32.gmra.mrb[0].mxu0 %v863
        %v1013 = vpop.f32.mrb[0].mxu0
        %v1014 = vadd.f32 %v483, %v1013
        %v1015 = vpop.f32.mrb[0].mxu0
        %1016 = vmatprep.mubr.f32.mxu0 0.0
        %1017 = vmatmul.mubr.f32.gmra.mrb[0].mxu0 %v864
        %v1018 = vpop.f32.mrb[0].mxu0
        %v1019 = vadd.f32 %v489, %v1018
        %v1020 = vpop.f32.mrb[0].mxu0
        %1021 = vmatprep.mubr.f32.mxu0 0.0
        %1022 = vmatmul.mubr.f32.gmra.mrb[0].mxu0 %v865
        %v1023 = vpop.f32.mrb[0].mxu0
        %v1024 = vadd.f32 %v495, %v1023
        %v1025 = vpop.f32.mrb[0].mxu0
        %1026 = vdwg.mxu0
        %vm1027 = vcmp.gt.f32.partialorder %v949, 20.0
        %vm1028 = vcmp.gt.f32.partialorder %v954, 20.0
        %vm1029 = vcmp.gt.f32.partialorder %v959, 20.0
        %vm1030 = vcmp.gt.f32.partialorder %v964, 20.0
        %vm1031 = vcmp.gt.f32.partialorder %v969, 20.0
        %vm1032 = vcmp.gt.f32.partialorder %v974, 20.0
        %vm1033 = vcmp.gt.f32.partialorder %v979, 20.0
        %vm1034 = vcmp.gt.f32.partialorder %v984, 20.0
        %vm1035 = vcmp.gt.f32.partialorder %v989, 20.0
        %vm1036 = vcmp.gt.f32.partialorder %v994, 20.0
        %vm1037 = vcmp.gt.f32.partialorder %v999, 20.0
        %vm1038 = vcmp.gt.f32.partialorder %v1004, 20.0
        %vm1039 = vcmp.gt.f32.partialorder %v1009, 20.0
        %vm1040 = vcmp.gt.f32.partialorder %v1014, 20.0
        %vm1041 = vcmp.gt.f32.partialorder %v1019, 20.0
        %vm1042 = vcmp.gt.f32.partialorder %v1024, 20.0
        %v1043 = vmul.f32 %v949, 1.442695
        %v1044 = vpow.pop %v1043
        %v1045 = vmul.f32 %v954, 1.442695
        %v1046 = vpow.pop %v1045
        %v1047 = vmul.f32 %v959, 1.442695
        %v1048 = vpow.pop %v1047
        %v1049 = vmul.f32 %v964, 1.442695
        %v1050 = vpow.pop %v1049
        %v1051 = vmul.f32 %v969, 1.442695
        %v1052 = vpow.pop %v1051
        %v1053 = vmul.f32 %v974, 1.442695
        %v1054 = vpow.pop %v1053
        %v1055 = vmul.f32 %v979, 1.442695
        %v1056 = vpow.pop %v1055
        %v1057 = vmul.f32 %v984, 1.442695
        %v1058 = vpow.pop %v1057
        %v1059 = vmul.f32 %v989, 1.442695
        %v1060 = vpow.pop %v1059
        %v1061 = vmul.f32 %v994, 1.442695
        %v1062 = vpow.pop %v1061
        %v1063 = vmul.f32 %v999, 1.442695
        %v1064 = vpow.pop %v1063
        %v1065 = vmul.f32 %v1004, 1.442695
        %v1066 = vpow.pop %v1065
        %v1067 = vmul.f32 %v1009, 1.442695
        %v1068 = vpow.pop %v1067
        %v1069 = vmul.f32 %v1014, 1.442695
        %v1070 = vpow.pop %v1069
        %v1071 = vmul.f32 %v1019, 1.442695
        %v1072 = vpow.pop %v1071
        %v1073 = vmul.f32 %v1024, 1.442695
        %v1074 = vpow.pop %v1073
        %v1075 = vadd.f32 %v1044, 1.0
        %v1076 = vlog2.pop %v1075
        %v1077 = vmul.f32 %v1076, 0.6931472
        %v1078 = vmul.f32 -0.5, %v1044
        %v1079 = vadd.f32 %v1078, 1.0
        %v1080 = vmul.f32 %v1079, %v1044
        %v1081 = vand.u32 2147483647, %v1044
        %vm1082 = vcmp.lt.f32.partialorder %v1081, 0.0004427343
        %v1083 = vsel %vm1082, %v1080, %v1077
        %v1084 = vadd.f32 %v1046, 1.0
        %v1085 = vlog2.pop %v1084
        %v1086 = vmul.f32 %v1085, 0.6931472
        %v1087 = vmul.f32 -0.5, %v1046
        %v1088 = vadd.f32 %v1087, 1.0
        %v1089 = vmul.f32 %v1088, %v1046
        %v1090 = vand.u32 2147483647, %v1046
        %vm1091 = vcmp.lt.f32.partialorder %v1090, 0.0004427343
        %v1092 = vsel %vm1091, %v1089, %v1086
        %v1093 = vadd.f32 %v1048, 1.0
        %v1094 = vlog2.pop %v1093
        %v1095 = vmul.f32 %v1094, 0.6931472
        %v1096 = vmul.f32 -0.5, %v1048
        %v1097 = vadd.f32 %v1096, 1.0
        %v1098 = vmul.f32 %v1097, %v1048
        %v1099 = vand.u32 2147483647, %v1048
        %vm1100 = vcmp.lt.f32.partialorder %v1099, 0.0004427343
        %v1101 = vsel %vm1100, %v1098, %v1095
        %v1102 = vadd.f32 %v1050, 1.0
        %v1103 = vlog2.pop %v1102
        %v1104 = vmul.f32 %v1103, 0.6931472
        %v1105 = vmul.f32 -0.5, %v1050
        %v1106 = vadd.f32 %v1105, 1.0
        %v1107 = vmul.f32 %v1106, %v1050
        %v1108 = vand.u32 2147483647, %v1050
        %vm1109 = vcmp.lt.f32.partialorder %v1108, 0.0004427343
        %v1110 = vsel %vm1109, %v1107, %v1104
        %v1111 = vadd.f32 %v1052, 1.0
        %v1112 = vlog2.pop %v1111
        %v1113 = vmul.f32 %v1112, 0.6931472
        %v1114 = vmul.f32 -0.5, %v1052
        %v1115 = vadd.f32 %v1114, 1.0
        %v1116 = vmul.f32 %v1115, %v1052
        %v1117 = vand.u32 2147483647, %v1052
        %vm1118 = vcmp.lt.f32.partialorder %v1117, 0.0004427343
        %v1119 = vsel %vm1118, %v1116, %v1113
        %v1120 = vadd.f32 %v1054, 1.0
        %v1121 = vlog2.pop %v1120
        %v1122 = vmul.f32 %v1121, 0.6931472
        %v1123 = vmul.f32 -0.5, %v1054
        %v1124 = vadd.f32 %v1123, 1.0
        %v1125 = vmul.f32 %v1124, %v1054
        %v1126 = vand.u32 2147483647, %v1054
        %vm1127 = vcmp.lt.f32.partialorder %v1126, 0.0004427343
        %v1128 = vsel %vm1127, %v1125, %v1122
        %v1129 = vadd.f32 %v1056, 1.0
        %v1130 = vlog2.pop %v1129
        %v1131 = vmul.f32 %v1130, 0.6931472
        %v1132 = vmul.f32 -0.5, %v1056
        %v1133 = vadd.f32 %v1132, 1.0
        %v1134 = vmul.f32 %v1133, %v1056
        %v1135 = vand.u32 2147483647, %v1056
        %vm1136 = vcmp.lt.f32.partialorder %v1135, 0.0004427343
        %v1137 = vsel %vm1136, %v1134, %v1131
        %v1138 = vadd.f32 %v1058, 1.0
        %v1139 = vlog2.pop %v1138
        %v1140 = vmul.f32 %v1139, 0.6931472
        %v1141 = vmul.f32 -0.5, %v1058
        %v1142 = vadd.f32 %v1141, 1.0
        %v1143 = vmul.f32 %v1142, %v1058
        %v1144 = vand.u32 2147483647, %v1058
        %vm1145 = vcmp.lt.f32.partialorder %v1144, 0.0004427343
        %v1146 = vsel %vm1145, %v1143, %v1140
        %v1147 = vadd.f32 %v1060, 1.0
        %v1148 = vlog2.pop %v1147
        %v1149 = vmul.f32 %v1148, 0.6931472
        %v1150 = vmul.f32 -0.5, %v1060
        %v1151 = vadd.f32 %v1150, 1.0
        %v1152 = vmul.f32 %v1151, %v1060
        %v1153 = vand.u32 2147483647, %v1060
        %vm1154 = vcmp.lt.f32.partialorder %v1153, 0.0004427343
        %v1155 = vsel %vm1154, %v1152, %v1149
        %v1156 = vadd.f32 %v1062, 1.0
        %v1157 = vlog2.pop %v1156
        %v1158 = vmul.f32 %v1157, 0.6931472
        %v1159 = vmul.f32 -0.5, %v1062
        %v1160 = vadd.f32 %v1159, 1.0
        %v1161 = vmul.f32 %v1160, %v1062
        %v1162 = vand.u32 2147483647, %v1062
        %vm1163 = vcmp.lt.f32.partialorder %v1162, 0.0004427343
        %v1164 = vsel %vm1163, %v1161, %v1158
        %v1165 = vadd.f32 %v1064, 1.0
        %v1166 = vlog2.pop %v1165
        %v1167 = vmul.f32 %v1166, 0.6931472
        %v1168 = vmul.f32 -0.5, %v1064
        %v1169 = vadd.f32 %v1168, 1.0
        %v1170 = vmul.f32 %v1169, %v1064
        %v1171 = vand.u32 2147483647, %v1064
        %vm1172 = vcmp.lt.f32.partialorder %v1171, 0.0004427343
        %v1173 = vsel %vm1172, %v1170, %v1167
        %v1174 = vadd.f32 %v1066, 1.0
        %v1175 = vlog2.pop %v1174
        %v1176 = vmul.f32 %v1175, 0.6931472
        %v1177 = vmul.f32 -0.5, %v1066
        %v1178 = vadd.f32 %v1177, 1.0
        %v1179 = vmul.f32 %v1178, %v1066
        %v1180 = vand.u32 2147483647, %v1066
        %vm1181 = vcmp.lt.f32.partialorder %v1180, 0.0004427343
        %v1182 = vsel %vm1181, %v1179, %v1176
        %v1183 = vadd.f32 %v1068, 1.0
        %v1184 = vlog2.pop %v1183
        %v1185 = vmul.f32 %v1184, 0.6931472
        %v1186 = vmul.f32 -0.5, %v1068
        %v1187 = vadd.f32 %v1186, 1.0
        %v1188 = vmul.f32 %v1187, %v1068
        %v1189 = vand.u32 2147483647, %v1068
        %vm1190 = vcmp.lt.f32.partialorder %v1189, 0.0004427343
        %v1191 = vsel %vm1190, %v1188, %v1185
        %v1192 = vadd.f32 %v1070, 1.0
        %v1193 = vlog2.pop %v1192
        %v1194 = vmul.f32 %v1193, 0.6931472
        %v1195 = vmul.f32 -0.5, %v1070
        %v1196 = vadd.f32 %v1195, 1.0
        %v1197 = vmul.f32 %v1196, %v1070
        %v1198 = vand.u32 2147483647, %v1070
        %vm1199 = vcmp.lt.f32.partialorder %v1198, 0.0004427343
        %v1200 = vsel %vm1199, %v1197, %v1194
        %v1201 = vadd.f32 %v1072, 1.0
        %v1202 = vlog2.pop %v1201
        %v1203 = vmul.f32 %v1202, 0.6931472
        %v1204 = vmul.f32 -0.5, %v1072
        %v1205 = vadd.f32 %v1204, 1.0
        %v1206 = vmul.f32 %v1205, %v1072
        %v1207 = vand.u32 2147483647, %v1072
        %vm1208 = vcmp.lt.f32.partialorder %v1207, 0.0004427343
        %v1209 = vsel %vm1208, %v1206, %v1203
        %v1210 = vadd.f32 %v1074, 1.0
        %v1211 = vlog2.pop %v1210
        %v1212 = vmul.f32 %v1211, 0.6931472
        %v1213 = vmul.f32 -0.5, %v1074
        %v1214 = vadd.f32 %v1213, 1.0
        %v1215 = vmul.f32 %v1214, %v1074
        %v1216 = vand.u32 2147483647, %v1074
        %vm1217 = vcmp.lt.f32.partialorder %v1216, 0.0004427343
        %v1218 = vsel %vm1217, %v1215, %v1212
        %v1219 = vsel %vm1027, %v949, %v1083
        %v1220 = vsel %vm1028, %v954, %v1092
        %v1221 = vsel %vm1029, %v959, %v1101
        %v1222 = vsel %vm1030, %v964, %v1110
        %v1223 = vsel %vm1031, %v969, %v1119
        %v1224 = vsel %vm1032, %v974, %v1128
        %v1225 = vsel %vm1033, %v979, %v1137
        %v1226 = vsel %vm1034, %v984, %v1146
        %v1227 = vsel %vm1035, %v989, %v1155
        %v1228 = vsel %vm1036, %v994, %v1164
        %v1229 = vsel %vm1037, %v999, %v1173
        %v1230 = vsel %vm1038, %v1004, %v1182
        %v1231 = vsel %vm1039, %v1009, %v1191
        %v1232 = vsel %vm1040, %v1014, %v1200
        %v1233 = vsel %vm1041, %v1019, %v1209
        %v1234 = vsel %vm1042, %v1024, %v1218
        %v1235 = vld [vmem:[%s3] sm:$0xff]
        %v1236 = vld [vmem:[%s3 + $0x8] sm:$0xff]
        %v1237 = vld [vmem:[%s3 + $0x10] sm:$0xff]
        %v1238 = vld [vmem:[%s3 + $0x18] sm:$0xff]
        %v1239 = vld [vmem:[%s3 + $0x20] sm:$0xff]
        %v1240 = vld [vmem:[%s3 + $0x28] sm:$0xff]
        %v1241 = vld [vmem:[%s3 + $0x30] sm:$0xff]
        %v1242 = vld [vmem:[%s3 + $0x38] sm:$0xff]
        %v1243 = vld [vmem:[%s3 + $0x40] sm:$0xff]
        %v1244 = vld [vmem:[%s3 + $0x48] sm:$0xff]
        %v1245 = vld [vmem:[%s3 + $0x50] sm:$0xff]
        %v1246 = vld [vmem:[%s3 + $0x58] sm:$0xff]
        %v1247 = vld [vmem:[%s3 + $0x60] sm:$0xff]
        %v1248 = vld [vmem:[%s3 + $0x68] sm:$0xff]
        %v1249 = vld [vmem:[%s3 + $0x70] sm:$0xff]
        %v1250 = vld [vmem:[%s3 + $0x78] sm:$0xff]
        %1251 = vmatprep.subr.mxu0 0.0
        %1252 = vmatpush1.msra.mxu0 %v1235
        %1253 = vmatprep.subr.mxu0 0.0
        %1254 = vmatpush1.msra.mxu0 %v1236
        %1255 = vmatprep.subr.mxu0 0.0
        %1256 = vmatpush1.msra.mxu0 %v1237
        %1257 = vmatprep.subr.mxu0 0.0
        %1258 = vmatpush1.msra.mxu0 %v1238
        %1259 = vmatprep.subr.mxu0 0.0
        %1260 = vmatpush1.msra.mxu0 %v1239
        %1261 = vmatprep.subr.mxu0 0.0
        %1262 = vmatpush1.msra.mxu0 %v1240
        %1263 = vmatprep.subr.mxu0 0.0
        %1264 = vmatpush1.msra.mxu0 %v1241
        %1265 = vmatprep.subr.mxu0 0.0
        %1266 = vmatpush1.msra.mxu0 %v1242
        %1267 = vmatprep.subr.mxu0 0.0
        %1268 = vmatpush1.msra.mxu0 %v1243
        %1269 = vmatprep.subr.mxu0 0.0
        %1270 = vmatpush1.msra.mxu0 %v1244
        %1271 = vmatprep.subr.mxu0 0.0
        %1272 = vmatpush1.msra.mxu0 %v1245
        %1273 = vmatprep.subr.mxu0 0.0
        %1274 = vmatpush1.msra.mxu0 %v1246
        %1275 = vmatprep.subr.mxu0 0.0
        %1276 = vmatpush1.msra.mxu0 %v1247
        %1277 = vmatprep.subr.mxu0 0.0
        %1278 = vmatpush1.msra.mxu0 %v1248
        %1279 = vmatprep.subr.mxu0 0.0
        %1280 = vmatpush1.msra.mxu0 %v1249
        %1281 = vmatprep.subr.mxu0 0.0
        %1282 = vmatpush1.msra.mxu0 %v1250
        %1283 = vmatprep.subr.mxu0 0.0
        %1284 = vmatpush1.msra.mxu0 0.0
        %1285 = vmatprep.subr.mxu0 0.0
        %1286 = vmatpush1.msra.mxu0 0.0
        %1287 = vmatprep.subr.mxu0 0.0
        %1288 = vmatpush1.msra.mxu0 0.0
        %1289 = vmatprep.subr.mxu0 0.0
        %1290 = vmatpush1.msra.mxu0 0.0
        %1291 = vmatprep.subr.mxu0 0.0
        %1292 = vmatpush1.msra.mxu0 0.0
        %1293 = vmatprep.subr.mxu0 0.0
        %1294 = vmatpush1.msra.mxu0 0.0
        %1295 = vmatprep.subr.mxu0 0.0
        %1296 = vmatpush1.msra.mxu0 0.0
        %1297 = vmatprep.subr.mxu0 0.0
        %1298 = vmatpush1.msra.mxu0 0.0
        %1299 = vmatprep.subr.mxu0 0.0
        %1300 = vmatpush1.msra.mxu0 0.0
        %1301 = vmatprep.subr.mxu0 0.0
        %1302 = vmatpush1.msra.mxu0 0.0
        %1303 = vmatprep.subr.mxu0 0.0
        %1304 = vmatpush1.msra.mxu0 0.0
        %1305 = vmatprep.subr.mxu0 0.0
        %1306 = vmatpush1.msra.mxu0 0.0
        %1307 = vmatprep.subr.mxu0 0.0
        %1308 = vmatpush1.msra.mxu0 0.0
        %1309 = vmatprep.subr.mxu0 0.0
        %1310 = vmatpush1.msra.mxu0 0.0
        %1311 = vmatprep.subr.mxu0 0.0
        %1312 = vmatpush1.msra.mxu0 0.0
        %1313 = vmatprep.subr.mxu0 0.0
        %1314 = vmatpush1.msra.mxu0 0.0
        %1315 = vmatprep.mubr.f32.mxu0 0.0
        %1316 = vmatmul.mubr.f32.gmra.mrb[0].mxu0 %v1219
        %v1317 = vpop.f32.mrb[0].mxu0
        %v1318 = vadd.f32 %v564, %v1317
        %v1319 = vpop.f32.mrb[0].mxu0
        %1320 = vmatprep.mubr.f32.mxu0 0.0
        %1321 = vmatmul.mubr.f32.gmra.mrb[0].mxu0 %v1220
        %v1322 = vpop.f32.mrb[0].mxu0
        %v1323 = vadd.f32 %v570, %v1322
        %v1324 = vpop.f32.mrb[0].mxu0
        %1325 = vmatprep.mubr.f32.mxu0 0.0
        %1326 = vmatmul.mubr.f32.gmra.mrb[0].mxu0 %v1221
        %v1327 = vpop.f32.mrb[0].mxu0
        %v1328 = vadd.f32 %v576, %v1327
        %v1329 = vpop.f32.mrb[0].mxu0
        %1330 = vmatprep.mubr.f32.mxu0 0.0
        %1331 = vmatmul.mubr.f32.gmra.mrb[0].mxu0 %v1222
        %v1332 = vpop.f32.mrb[0].mxu0
        %v1333 = vadd.f32 %v582, %v1332
        %v1334 = vpop.f32.mrb[0].mxu0
        %1335 = vmatprep.mubr.f32.mxu0 0.0
        %1336 = vmatmul.mubr.f32.gmra.mrb[0].mxu0 %v1223
        %v1337 = vpop.f32.mrb[0].mxu0
        %v1338 = vadd.f32 %v588, %v1337
        %v1339 = vpop.f32.mrb[0].mxu0
        %1340 = vmatprep.mubr.f32.mxu0 0.0
        %1341 = vmatmul.mubr.f32.gmra.mrb[0].mxu0 %v1224
        %v1342 = vpop.f32.mrb[0].mxu0
        %v1343 = vadd.f32 %v594, %v1342
        %v1344 = vpop.f32.mrb[0].mxu0
        %1345 = vmatprep.mubr.f32.mxu0 0.0
        %1346 = vmatmul.mubr.f32.gmra.mrb[0].mxu0 %v1225
        %v1347 = vpop.f32.mrb[0].mxu0
        %v1348 = vadd.f32 %v600, %v1347
        %v1349 = vpop.f32.mrb[0].mxu0
        %1350 = vmatprep.mubr.f32.mxu0 0.0
        %1351 = vmatmul.mubr.f32.gmra.mrb[0].mxu0 %v1226
        %v1352 = vpop.f32.mrb[0].mxu0
        %v1353 = vadd.f32 %v606, %v1352
        %v1354 = vpop.f32.mrb[0].mxu0
        %1355 = vmatprep.mubr.f32.mxu0 0.0
        %1356 = vmatmul.mubr.f32.gmra.mrb[0].mxu0 %v1227
        %v1357 = vpop.f32.mrb[0].mxu0
        %v1358 = vadd.f32 %v612, %v1357
        %v1359 = vpop.f32.mrb[0].mxu0
        %1360 = vmatprep.mubr.f32.mxu0 0.0
        %1361 = vmatmul.mubr.f32.gmra.mrb[0].mxu0 %v1228
        %v1362 = vpop.f32.mrb[0].mxu0
        %v1363 = vadd.f32 %v618, %v1362
        %v1364 = vpop.f32.mrb[0].mxu0
        %1365 = vmatprep.mubr.f32.mxu0 0.0
        %1366 = vmatmul.mubr.f32.gmra.mrb[0].mxu0 %v1229
        %v1367 = vpop.f32.mrb[0].mxu0
        %v1368 = vadd.f32 %v624, %v1367
        %v1369 = vpop.f32.mrb[0].mxu0
        %1370 = vmatprep.mubr.f32.mxu0 0.0
        %1371 = vmatmul.mubr.f32.gmra.mrb[0].mxu0 %v1230
        %v1372 = vpop.f32.mrb[0].mxu0
        %v1373 = vadd.f32 %v630, %v1372
        %v1374 = vpop.f32.mrb[0].mxu0
        %1375 = vmatprep.mubr.f32.mxu0 0.0
        %1376 = vmatmul.mubr.f32.gmra.mrb[0].mxu0 %v1231
        %v1377 = vpop.f32.mrb[0].mxu0
        %v1378 = vadd.f32 %v636, %v1377
        %v1379 = vpop.f32.mrb[0].mxu0
        %1380 = vmatprep.mubr.f32.mxu0 0.0
        %1381 = vmatmul.mubr.f32.gmra.mrb[0].mxu0 %v1232
        %v1382 = vpop.f32.mrb[0].mxu0
        %v1383 = vadd.f32 %v642, %v1382
        %v1384 = vpop.f32.mrb[0].mxu0
        %1385 = vmatprep.mubr.f32.mxu0 0.0
        %1386 = vmatmul.mubr.f32.gmra.mrb[0].mxu0 %v1233
        %v1387 = vpop.f32.mrb[0].mxu0
        %v1388 = vadd.f32 %v648, %v1387
        %v1389 = vpop.f32.mrb[0].mxu0
        %1390 = vmatprep.mubr.f32.mxu0 0.0
        %1391 = vmatmul.mubr.f32.gmra.mrb[0].mxu0 %v1234
        %v1392 = vpop.f32.mrb[0].mxu0
        %v1393 = vadd.f32 %v654, %v1392
        %v1394 = vpop.f32.mrb[0].mxu0
        %1395 = vdwg.mxu0
        %vm1396 = vcmp.gt.f32.partialorder %v1318, 20.0
        %vm1397 = vcmp.gt.f32.partialorder %v1323, 20.0
        %vm1398 = vcmp.gt.f32.partialorder %v1328, 20.0
        %vm1399 = vcmp.gt.f32.partialorder %v1333, 20.0
        %vm1400 = vcmp.gt.f32.partialorder %v1338, 20.0
        %vm1401 = vcmp.gt.f32.partialorder %v1343, 20.0
        %vm1402 = vcmp.gt.f32.partialorder %v1348, 20.0
        %vm1403 = vcmp.gt.f32.partialorder %v1353, 20.0
        %vm1404 = vcmp.gt.f32.partialorder %v1358, 20.0
        %vm1405 = vcmp.gt.f32.partialorder %v1363, 20.0
        %vm1406 = vcmp.gt.f32.partialorder %v1368, 20.0
        %vm1407 = vcmp.gt.f32.partialorder %v1373, 20.0
        %vm1408 = vcmp.gt.f32.partialorder %v1378, 20.0
        %vm1409 = vcmp.gt.f32.partialorder %v1383, 20.0
        %vm1410 = vcmp.gt.f32.partialorder %v1388, 20.0
        %vm1411 = vcmp.gt.f32.partialorder %v1393, 20.0
        %v1412 = vmul.f32 %v1318, 1.442695
        %v1413 = vpow.pop %v1412
        %v1414 = vmul.f32 %v1323, 1.442695
        %v1415 = vpow.pop %v1414
        %v1416 = vmul.f32 %v1328, 1.442695
        %v1417 = vpow.pop %v1416
        %v1418 = vmul.f32 %v1333, 1.442695
        %v1419 = vpow.pop %v1418
        %v1420 = vmul.f32 %v1338, 1.442695
        %v1421 = vpow.pop %v1420
        %v1422 = vmul.f32 %v1343, 1.442695
        %v1423 = vpow.pop %v1422
        %v1424 = vmul.f32 %v1348, 1.442695
        %v1425 = vpow.pop %v1424
        %v1426 = vmul.f32 %v1353, 1.442695
        %v1427 = vpow.pop %v1426
        %v1428 = vmul.f32 %v1358, 1.442695
        %v1429 = vpow.pop %v1428
        %v1430 = vmul.f32 %v1363, 1.442695
        %v1431 = vpow.pop %v1430
        %v1432 = vmul.f32 %v1368, 1.442695
        %v1433 = vpow.pop %v1432
        %v1434 = vmul.f32 %v1373, 1.442695
        %v1435 = vpow.pop %v1434
        %v1436 = vmul.f32 %v1378, 1.442695
        %v1437 = vpow.pop %v1436
        %v1438 = vmul.f32 %v1383, 1.442695
        %v1439 = vpow.pop %v1438
        %v1440 = vmul.f32 %v1388, 1.442695
        %v1441 = vpow.pop %v1440
        %v1442 = vmul.f32 %v1393, 1.442695
        %v1443 = vpow.pop %v1442
        %v1444 = vadd.f32 %v1413, 1.0
        %v1445 = vlog2.pop %v1444
        %v1446 = vmul.f32 %v1445, 0.6931472
        %v1447 = vmul.f32 -0.5, %v1413
        %v1448 = vadd.f32 %v1447, 1.0
        %v1449 = vmul.f32 %v1448, %v1413
        %v1450 = vand.u32 2147483647, %v1413
        %vm1451 = vcmp.lt.f32.partialorder %v1450, 0.0004427343
        %v1452 = vsel %vm1451, %v1449, %v1446
        %v1453 = vadd.f32 %v1415, 1.0
        %v1454 = vlog2.pop %v1453
        %v1455 = vmul.f32 %v1454, 0.6931472
        %v1456 = vmul.f32 -0.5, %v1415
        %v1457 = vadd.f32 %v1456, 1.0
        %v1458 = vmul.f32 %v1457, %v1415
        %v1459 = vand.u32 2147483647, %v1415
        %vm1460 = vcmp.lt.f32.partialorder %v1459, 0.0004427343
        %v1461 = vsel %vm1460, %v1458, %v1455
        %v1462 = vadd.f32 %v1417, 1.0
        %v1463 = vlog2.pop %v1462
        %v1464 = vmul.f32 %v1463, 0.6931472
        %v1465 = vmul.f32 -0.5, %v1417
        %v1466 = vadd.f32 %v1465, 1.0
        %v1467 = vmul.f32 %v1466, %v1417
        %v1468 = vand.u32 2147483647, %v1417
        %vm1469 = vcmp.lt.f32.partialorder %v1468, 0.0004427343
        %v1470 = vsel %vm1469, %v1467, %v1464
        %v1471 = vadd.f32 %v1419, 1.0
        %v1472 = vlog2.pop %v1471
        %v1473 = vmul.f32 %v1472, 0.6931472
        %v1474 = vmul.f32 -0.5, %v1419
        %v1475 = vadd.f32 %v1474, 1.0
        %v1476 = vmul.f32 %v1475, %v1419
        %v1477 = vand.u32 2147483647, %v1419
        %vm1478 = vcmp.lt.f32.partialorder %v1477, 0.0004427343
        %v1479 = vsel %vm1478, %v1476, %v1473
        %v1480 = vadd.f32 %v1421, 1.0
        %v1481 = vlog2.pop %v1480
        %v1482 = vmul.f32 %v1481, 0.6931472
        %v1483 = vmul.f32 -0.5, %v1421
        %v1484 = vadd.f32 %v1483, 1.0
        %v1485 = vmul.f32 %v1484, %v1421
        %v1486 = vand.u32 2147483647, %v1421
        %vm1487 = vcmp.lt.f32.partialorder %v1486, 0.0004427343
        %v1488 = vsel %vm1487, %v1485, %v1482
        %v1489 = vadd.f32 %v1423, 1.0
        %v1490 = vlog2.pop %v1489
        %v1491 = vmul.f32 %v1490, 0.6931472
        %v1492 = vmul.f32 -0.5, %v1423
        %v1493 = vadd.f32 %v1492, 1.0
        %v1494 = vmul.f32 %v1493, %v1423
        %v1495 = vand.u32 2147483647, %v1423
        %vm1496 = vcmp.lt.f32.partialorder %v1495, 0.0004427343
        %v1497 = vsel %vm1496, %v1494, %v1491
        %v1498 = vadd.f32 %v1425, 1.0
        %v1499 = vlog2.pop %v1498
        %v1500 = vmul.f32 %v1499, 0.6931472
        %v1501 = vmul.f32 -0.5, %v1425
        %v1502 = vadd.f32 %v1501, 1.0
        %v1503 = vmul.f32 %v1502, %v1425
        %v1504 = vand.u32 2147483647, %v1425
        %vm1505 = vcmp.lt.f32.partialorder %v1504, 0.0004427343
        %v1506 = vsel %vm1505, %v1503, %v1500
        %v1507 = vadd.f32 %v1427, 1.0
        %v1508 = vlog2.pop %v1507
        %v1509 = vmul.f32 %v1508, 0.6931472
        %v1510 = vmul.f32 -0.5, %v1427
        %v1511 = vadd.f32 %v1510, 1.0
        %v1512 = vmul.f32 %v1511, %v1427
        %v1513 = vand.u32 2147483647, %v1427
        %vm1514 = vcmp.lt.f32.partialorder %v1513, 0.0004427343
        %v1515 = vsel %vm1514, %v1512, %v1509
        %v1516 = vadd.f32 %v1429, 1.0
        %v1517 = vlog2.pop %v1516
        %v1518 = vmul.f32 %v1517, 0.6931472
        %v1519 = vmul.f32 -0.5, %v1429
        %v1520 = vadd.f32 %v1519, 1.0
        %v1521 = vmul.f32 %v1520, %v1429
        %v1522 = vand.u32 2147483647, %v1429
        %vm1523 = vcmp.lt.f32.partialorder %v1522, 0.0004427343
        %v1524 = vsel %vm1523, %v1521, %v1518
        %v1525 = vadd.f32 %v1431, 1.0
        %v1526 = vlog2.pop %v1525
        %v1527 = vmul.f32 %v1526, 0.6931472
        %v1528 = vmul.f32 -0.5, %v1431
        %v1529 = vadd.f32 %v1528, 1.0
        %v1530 = vmul.f32 %v1529, %v1431
        %v1531 = vand.u32 2147483647, %v1431
        %vm1532 = vcmp.lt.f32.partialorder %v1531, 0.0004427343
        %v1533 = vsel %vm1532, %v1530, %v1527
        %v1534 = vadd.f32 %v1433, 1.0
        %v1535 = vlog2.pop %v1534
        %v1536 = vmul.f32 %v1535, 0.6931472
        %v1537 = vmul.f32 -0.5, %v1433
        %v1538 = vadd.f32 %v1537, 1.0
        %v1539 = vmul.f32 %v1538, %v1433
        %v1540 = vand.u32 2147483647, %v1433
        %vm1541 = vcmp.lt.f32.partialorder %v1540, 0.0004427343
        %v1542 = vsel %vm1541, %v1539, %v1536
        %v1543 = vadd.f32 %v1435, 1.0
        %v1544 = vlog2.pop %v1543
        %v1545 = vmul.f32 %v1544, 0.6931472
        %v1546 = vmul.f32 -0.5, %v1435
        %v1547 = vadd.f32 %v1546, 1.0
        %v1548 = vmul.f32 %v1547, %v1435
        %v1549 = vand.u32 2147483647, %v1435
        %vm1550 = vcmp.lt.f32.partialorder %v1549, 0.0004427343
        %v1551 = vsel %vm1550, %v1548, %v1545
        %v1552 = vadd.f32 %v1437, 1.0
        %v1553 = vlog2.pop %v1552
        %v1554 = vmul.f32 %v1553, 0.6931472
        %v1555 = vmul.f32 -0.5, %v1437
        %v1556 = vadd.f32 %v1555, 1.0
        %v1557 = vmul.f32 %v1556, %v1437
        %v1558 = vand.u32 2147483647, %v1437
        %vm1559 = vcmp.lt.f32.partialorder %v1558, 0.0004427343
        %v1560 = vsel %vm1559, %v1557, %v1554
        %v1561 = vadd.f32 %v1439, 1.0
        %v1562 = vlog2.pop %v1561
        %v1563 = vmul.f32 %v1562, 0.6931472
        %v1564 = vmul.f32 -0.5, %v1439
        %v1565 = vadd.f32 %v1564, 1.0
        %v1566 = vmul.f32 %v1565, %v1439
        %v1567 = vand.u32 2147483647, %v1439
        %vm1568 = vcmp.lt.f32.partialorder %v1567, 0.0004427343
        %v1569 = vsel %vm1568, %v1566, %v1563
        %v1570 = vadd.f32 %v1441, 1.0
        %v1571 = vlog2.pop %v1570
        %v1572 = vmul.f32 %v1571, 0.6931472
        %v1573 = vmul.f32 -0.5, %v1441
        %v1574 = vadd.f32 %v1573, 1.0
        %v1575 = vmul.f32 %v1574, %v1441
        %v1576 = vand.u32 2147483647, %v1441
        %vm1577 = vcmp.lt.f32.partialorder %v1576, 0.0004427343
        %v1578 = vsel %vm1577, %v1575, %v1572
        %v1579 = vadd.f32 %v1443, 1.0
        %v1580 = vlog2.pop %v1579
        %v1581 = vmul.f32 %v1580, 0.6931472
        %v1582 = vmul.f32 -0.5, %v1443
        %v1583 = vadd.f32 %v1582, 1.0
        %v1584 = vmul.f32 %v1583, %v1443
        %v1585 = vand.u32 2147483647, %v1443
        %vm1586 = vcmp.lt.f32.partialorder %v1585, 0.0004427343
        %v1587 = vsel %vm1586, %v1584, %v1581
        %v1588 = vsel %vm1396, %v1318, %v1452
        %v1589 = vsel %vm1397, %v1323, %v1461
        %v1590 = vsel %vm1398, %v1328, %v1470
        %v1591 = vsel %vm1399, %v1333, %v1479
        %v1592 = vsel %vm1400, %v1338, %v1488
        %v1593 = vsel %vm1401, %v1343, %v1497
        %v1594 = vsel %vm1402, %v1348, %v1506
        %v1595 = vsel %vm1403, %v1353, %v1515
        %v1596 = vsel %vm1404, %v1358, %v1524
        %v1597 = vsel %vm1405, %v1363, %v1533
        %v1598 = vsel %vm1406, %v1368, %v1542
        %v1599 = vsel %vm1407, %v1373, %v1551
        %v1600 = vsel %vm1408, %v1378, %v1560
        %v1601 = vsel %vm1409, %v1383, %v1569
        %v1602 = vsel %vm1410, %v1388, %v1578
        %v1603 = vsel %vm1411, %v1393, %v1587
        %v1604 = vld [vmem:[#allocation5] sm:$0xff]
        %v1605 = vld [vmem:[#allocation5 + $0x8] sm:$0xff]
        %v1606 = vld [vmem:[#allocation5 + $0x10] sm:$0xff]
        %v1607 = vld [vmem:[#allocation5 + $0x18] sm:$0xff]
        %v1608 = vld [vmem:[#allocation5 + $0x20] sm:$0xff]
        %v1609 = vld [vmem:[#allocation5 + $0x28] sm:$0xff]
        %v1610 = vld [vmem:[#allocation5 + $0x30] sm:$0xff]
        %v1611 = vld [vmem:[#allocation5 + $0x38] sm:$0xff]
        %v1612 = vld [vmem:[#allocation5 + $0x40] sm:$0xff]
        %v1613 = vld [vmem:[#allocation5 + $0x48] sm:$0xff]
        %v1614 = vld [vmem:[#allocation5 + $0x50] sm:$0xff]
        %v1615 = vld [vmem:[#allocation5 + $0x58] sm:$0xff]
        %v1616 = vld [vmem:[#allocation5 + $0x60] sm:$0xff]
        %v1617 = vld [vmem:[#allocation5 + $0x68] sm:$0xff]
        %v1618 = vld [vmem:[#allocation5 + $0x70] sm:$0xff]
        %v1619 = vld [vmem:[#allocation5 + $0x78] sm:$0xff]
        %1620 = vmatprep.subr.mxu0 0.0
        %1621 = vmatpush1.msra.mxu0 %v1604
        %1622 = vmatprep.subr.mxu0 0.0
        %1623 = vmatpush1.msra.mxu0 %v1605
        %1624 = vmatprep.subr.mxu0 0.0
        %1625 = vmatpush1.msra.mxu0 %v1606
        %1626 = vmatprep.subr.mxu0 0.0
        %1627 = vmatpush1.msra.mxu0 %v1607
        %1628 = vmatprep.subr.mxu0 0.0
        %1629 = vmatpush1.msra.mxu0 %v1608
        %1630 = vmatprep.subr.mxu0 0.0
        %1631 = vmatpush1.msra.mxu0 %v1609
        %1632 = vmatprep.subr.mxu0 0.0
        %1633 = vmatpush1.msra.mxu0 %v1610
        %1634 = vmatprep.subr.mxu0 0.0
        %1635 = vmatpush1.msra.mxu0 %v1611
        %1636 = vmatprep.subr.mxu0 0.0
        %1637 = vmatpush1.msra.mxu0 %v1612
        %1638 = vmatprep.subr.mxu0 0.0
        %1639 = vmatpush1.msra.mxu0 %v1613
        %1640 = vmatprep.subr.mxu0 0.0
        %1641 = vmatpush1.msra.mxu0 %v1614
        %1642 = vmatprep.subr.mxu0 0.0
        %1643 = vmatpush1.msra.mxu0 %v1615
        %1644 = vmatprep.subr.mxu0 0.0
        %1645 = vmatpush1.msra.mxu0 %v1616
        %1646 = vmatprep.subr.mxu0 0.0
        %1647 = vmatpush1.msra.mxu0 %v1617
        %1648 = vmatprep.subr.mxu0 0.0
        %1649 = vmatpush1.msra.mxu0 %v1618
        %1650 = vmatprep.subr.mxu0 0.0
        %1651 = vmatpush1.msra.mxu0 %v1619
        %1652 = vmatprep.subr.mxu0 0.0
        %1653 = vmatpush1.msra.mxu0 0.0
        %1654 = vmatprep.subr.mxu0 0.0
        %1655 = vmatpush1.msra.mxu0 0.0
        %1656 = vmatprep.subr.mxu0 0.0
        %1657 = vmatpush1.msra.mxu0 0.0
        %1658 = vmatprep.subr.mxu0 0.0
        %1659 = vmatpush1.msra.mxu0 0.0
        %1660 = vmatprep.subr.mxu0 0.0
        %1661 = vmatpush1.msra.mxu0 0.0
        %1662 = vmatprep.subr.mxu0 0.0
        %1663 = vmatpush1.msra.mxu0 0.0
        %1664 = vmatprep.subr.mxu0 0.0
        %1665 = vmatpush1.msra.mxu0 0.0
        %1666 = vmatprep.subr.mxu0 0.0
        %1667 = vmatpush1.msra.mxu0 0.0
        %1668 = vmatprep.subr.mxu0 0.0
        %1669 = vmatpush1.msra.mxu0 0.0
        %1670 = vmatprep.subr.mxu0 0.0
        %1671 = vmatpush1.msra.mxu0 0.0
        %1672 = vmatprep.subr.mxu0 0.0
        %1673 = vmatpush1.msra.mxu0 0.0
        %1674 = vmatprep.subr.mxu0 0.0
        %1675 = vmatpush1.msra.mxu0 0.0
        %1676 = vmatprep.subr.mxu0 0.0
        %1677 = vmatpush1.msra.mxu0 0.0
        %1678 = vmatprep.subr.mxu0 0.0
        %1679 = vmatpush1.msra.mxu0 0.0
        %1680 = vmatprep.subr.mxu0 0.0
        %1681 = vmatpush1.msra.mxu0 0.0
        %1682 = vmatprep.subr.mxu0 0.0
        %1683 = vmatpush1.msra.mxu0 0.0
        %1684 = vmatprep.mubr.f32.mxu0 0.0
        %1685 = vmatmul.mubr.f32.gmra.mrb[0].mxu0 %v1588
        %v1686 = vpop.f32.mrb[0].mxu0
        %v1687 = vadd.f32 %v566, %v1686
        %v1688 = vpop.f32.mrb[0].mxu0
        %1689 = vmatprep.mubr.f32.mxu0 0.0
        %1690 = vmatmul.mubr.f32.gmra.mrb[0].mxu0 %v1589
        %v1691 = vpop.f32.mrb[0].mxu0
        %v1692 = vadd.f32 %v572, %v1691
        %v1693 = vpop.f32.mrb[0].mxu0
        %1694 = vmatprep.mubr.f32.mxu0 0.0
        %1695 = vmatmul.mubr.f32.gmra.mrb[0].mxu0 %v1590
        %v1696 = vpop.f32.mrb[0].mxu0
        %v1697 = vadd.f32 %v578, %v1696
        %v1698 = vpop.f32.mrb[0].mxu0
        %1699 = vmatprep.mubr.f32.mxu0 0.0
        %1700 = vmatmul.mubr.f32.gmra.mrb[0].mxu0 %v1591
        %v1701 = vpop.f32.mrb[0].mxu0
        %v1702 = vadd.f32 %v584, %v1701
        %v1703 = vpop.f32.mrb[0].mxu0
        %1704 = vmatprep.mubr.f32.mxu0 0.0
        %1705 = vmatmul.mubr.f32.gmra.mrb[0].mxu0 %v1592
        %v1706 = vpop.f32.mrb[0].mxu0
        %v1707 = vadd.f32 %v590, %v1706
        %v1708 = vpop.f32.mrb[0].mxu0
        %1709 = vmatprep.mubr.f32.mxu0 0.0
        %1710 = vmatmul.mubr.f32.gmra.mrb[0].mxu0 %v1593
        %v1711 = vpop.f32.mrb[0].mxu0
        %v1712 = vadd.f32 %v596, %v1711
        %v1713 = vpop.f32.mrb[0].mxu0
        %1714 = vmatprep.mubr.f32.mxu0 0.0
        %1715 = vmatmul.mubr.f32.gmra.mrb[0].mxu0 %v1594
        %v1716 = vpop.f32.mrb[0].mxu0
        %v1717 = vadd.f32 %v602, %v1716
        %v1718 = vpop.f32.mrb[0].mxu0
        %1719 = vmatprep.mubr.f32.mxu0 0.0
        %1720 = vmatmul.mubr.f32.gmra.mrb[0].mxu0 %v1595
        %v1721 = vpop.f32.mrb[0].mxu0
        %v1722 = vadd.f32 %v608, %v1721
        %v1723 = vpop.f32.mrb[0].mxu0
        %1724 = vmatprep.mubr.f32.mxu0 0.0
        %1725 = vmatmul.mubr.f32.gmra.mrb[0].mxu0 %v1596
        %v1726 = vpop.f32.mrb[0].mxu0
        %v1727 = vadd.f32 %v614, %v1726
        %v1728 = vpop.f32.mrb[0].mxu0
        %1729 = vmatprep.mubr.f32.mxu0 0.0
        %1730 = vmatmul.mubr.f32.gmra.mrb[0].mxu0 %v1597
        %v1731 = vpop.f32.mrb[0].mxu0
        %v1732 = vadd.f32 %v620, %v1731
        %v1733 = vpop.f32.mrb[0].mxu0
        %1734 = vmatprep.mubr.f32.mxu0 0.0
        %1735 = vmatmul.mubr.f32.gmra.mrb[0].mxu0 %v1598
        %v1736 = vpop.f32.mrb[0].mxu0
        %v1737 = vadd.f32 %v626, %v1736
        %v1738 = vpop.f32.mrb[0].mxu0
        %1739 = vmatprep.mubr.f32.mxu0 0.0
        %1740 = vmatmul.mubr.f32.gmra.mrb[0].mxu0 %v1599
        %v1741 = vpop.f32.mrb[0].mxu0
        %v1742 = vadd.f32 %v632, %v1741
        %v1743 = vpop.f32.mrb[0].mxu0
        %1744 = vmatprep.mubr.f32.mxu0 0.0
        %1745 = vmatmul.mubr.f32.gmra.mrb[0].mxu0 %v1600
        %v1746 = vpop.f32.mrb[0].mxu0
        %v1747 = vadd.f32 %v638, %v1746
        %v1748 = vpop.f32.mrb[0].mxu0
        %1749 = vmatprep.mubr.f32.mxu0 0.0
        %1750 = vmatmul.mubr.f32.gmra.mrb[0].mxu0 %v1601
        %v1751 = vpop.f32.mrb[0].mxu0
        %v1752 = vadd.f32 %v644, %v1751
        %v1753 = vpop.f32.mrb[0].mxu0
        %1754 = vmatprep.mubr.f32.mxu0 0.0
        %1755 = vmatmul.mubr.f32.gmra.mrb[0].mxu0 %v1602
        %v1756 = vpop.f32.mrb[0].mxu0
        %v1757 = vadd.f32 %v650, %v1756
        %v1758 = vpop.f32.mrb[0].mxu0
        %1759 = vmatprep.mubr.f32.mxu0 0.0
        %1760 = vmatmul.mubr.f32.gmra.mrb[0].mxu0 %v1603
        %v1761 = vpop.f32.mrb[0].mxu0
        %v1762 = vadd.f32 %v656, %v1761
        %v1763 = vpop.f32.mrb[0].mxu0
        %1764 = vdwg.mxu0
        %1765 = vst [vmem:[%s246] sm:$0xff] %v1687
        %1766 = vst [vmem:[%s246 + $0x8] sm:$0xff] %v1692
        %1767 = vst [vmem:[%s246 + $0x10] sm:$0xff] %v1697
        %1768 = vst [vmem:[%s246 + $0x18] sm:$0xff] %v1702
        %1769 = vst [vmem:[%s246 + $0x20] sm:$0xff] %v1707
        %1770 = vst [vmem:[%s246 + $0x28] sm:$0xff] %v1712
        %1771 = vst [vmem:[%s246 + $0x30] sm:$0xff] %v1717
        %1772 = vst [vmem:[%s246 + $0x38] sm:$0xff] %v1722
        %1773 = vst [vmem:[%s246 + $0x40] sm:$0xff] %v1727
        %1774 = vst [vmem:[%s246 + $0x48] sm:$0xff] %v1732
        %1775 = vst [vmem:[%s246 + $0x50] sm:$0xff] %v1737
        %1776 = vst [vmem:[%s246 + $0x58] sm:$0xff] %v1742
        %1777 = vst [vmem:[%s246 + $0x60] sm:$0xff] %v1747
        %1778 = vst [vmem:[%s246 + $0x68] sm:$0xff] %v1752
        %1779 = vst [vmem:[%s246 + $0x70] sm:$0xff] %v1757
        %1780 = vst [vmem:[%s246 + $0x78] sm:$0xff] %v1762
        %s1781 = sand.u32 %s139, 1
        %s1782 = scalar_lea.sflag [#allocation4], %s1781
        %s1783 = sand.u32 %s139, 1
        %s1784 = smul.addr %s1783, 128
        %s1785 = scalar_lea.vmem [#allocation7], %s1784
        // Predicated region
        $region49: #{tpu_custom_call.1} parent=39 // pred_check
          %p1786 = pneg %p149
        $region50: #{tpu_custom_call.1} parent=39 // pred_check_branch
          %1788 = sbr.rel (%p1786) target = $region52
        $region51: #{tpu_custom_call.1} parent=39 // pred_region
          %s1789 = smul.u32 16, %s21
          %s1791 = ssub.s32 2048, 2048
          %1792 = vsyncadd %s1782, %s1791
          %s1793 = smul.addr %s1789, 128
          %s1794 = scalar_lea.hbm %s5, %s1793
          %s1795 = sshll.u32 %s1785, 4
          %s1796 = int_to_ptr.vmem [resolvable:$true] %s1795
          %1801 = dma.vmem_to_hbm [thread:$0]  %s1796, 2048, %s1794, %s1782, 128, 128, 8
        $region52: #{tpu_custom_call.1} parent=39 // pred_fallthru
          _
      $region40: #{tpu_custom_call.1} parent=5 // pred_fallthru
        _
      %p1802 = scmp.le.s32.totalorder 2, %s16
      // Predicated region
      $region53: #{tpu_custom_call.1} parent=5 // pred_check
        %p1803 = pneg %p1802
      $region54: #{tpu_custom_call.1} parent=5 // pred_check_branch
        %1805 = sbr.rel (%p1803) target = $region56
      $region55: #{tpu_custom_call.1} parent=5 // pred_region
        %s1806 = ssub.s32 %s16, 2
        // Predicated region
        $region57: #{tpu_custom_call.1} parent=55 // pred_check
          %p1807 = pneg %p155
        $region58: #{tpu_custom_call.1} parent=55 // pred_check_branch
          %1809 = sbr.rel (%p1807) target = $region60
        $region59: #{tpu_custom_call.1} parent=55 // pred_region
          %s1810 = sand.u32 %s140, 1
          %s1811 = scalar_lea.sflag [#allocation4], %s1810
          %s1812 = sand.u32 %s140, 1
          %s1813 = smul.addr %s1812, 128
          %s1814 = scalar_lea.vmem [#allocation7], %s1813
          %1815 = dma.done %s1811, 2048
        $region60: #{tpu_custom_call.1} parent=55 // pred_fallthru
          _
      $region56: #{tpu_custom_call.1} parent=5 // pred_fallthru
        _
    $region6: #{tpu_custom_call.1} parent=1 // loop_footer
      %s20 = sadd.s32 1, %s16
    $region7: #{tpu_custom_call.1} parent=1 // loop_footer_branch
      %15 = sbr.rel target = $region3
    $region8: #{tpu_custom_call.1} parent=1 // loop_exit
      _
    %1816 = vsyncpa [#allocation3], 1
    %s1817 = scalar_lea.sflag [#allocation3], 1
    %1818 = vsyncpa %s1817, 1
    %1819 = vsyncpa [#allocation6], 1
    %1820 = vsyncpa [#allocation4], 1
    %s1821 = scalar_lea.sflag [#allocation4], 1
    %1822 = vsyncpa %s1821, 1

</llo_original>
